<compile_context>
chip_gen: v7x
topology: tpu7x:2x2x1
jax: 0.10.0
libtpu: 0.0.40
codegen_flags: <defaults>
</compile_context>

<pallas_src>
import jax
import jax.numpy as jnp
from jax import lax
from jax.experimental import pallas as pl
from jax.experimental.pallas import tpu as pltpu

# ---------------- static config (mirrors ArtGS args) ----------------
NUM_SLOTS = 4                       # K  (args.num_slots, use_art_type_prior=False)
SLOT_SIZE = 32                      # args.slot_size
GRID_LEVELS = 12                    # ProgressiveBandHashGrid n_levels
GRID_START_LEVEL = 6
GRID_FEATS = GRID_LEVELS * 2        # n_output_dims (2 feats / level) = 24
SCALE_FACTOR = 1.0
SHIFT_WEIGHT = 0.5                  # eval -> tau=0.1 -> hard gumbel softmax

K = NUM_SLOTS
H = SLOT_SIZE
G = GRID_FEATS                      # 24
IN_DIM = 4 * K + G + 3              # 43 = [rel(4K), grid(G), xyz(3)]
IN_PAD = 48                         # MLP contraction: +bias-1 column +zeros
REL_BASE = G                        # aff rows 24..35 : rel components (c*K + k)
XT_BASE = G + 3 * K                 # aff rows 36..59 : xt (s*12 + c*K + k)
AFF_ROWS = 64                       # 24 grid + 12 rel + 24 xt + 4 pad
OUT_ROWS = 8                        # [xt0(3), xt1(3), slot_idx(1), pad(1)]

MAX_TILE_N = 8192
MIN_TILE_N = 1024


# ---------------- fused Pallas kernel ----------------
def artgs_kernel(x_ref, wa_ref, w1t_ref, w2t_ref, b2_ref, out_ref):
    """CenterBasedSeg + per-slot affine deform (both states) for one tile.

    x_ref   : (3, TN)  f32   canonical gaussian centers, feature-major
    wa_ref  : (64, 8)  f32   fused affine table applied to [x; 1; 0...]:
                               rows  0..23  level-masked grid-encoding dirs
                               rows 24..35  rel_k = diag(1/s_k) R_k (p - c_k)
                               rows 36..59  xt_{s,k} = R_{s,k} p + t_{s,k}
    w1t_ref : (H, 48)  bf16  permuted W1^T, b1 folded into the bias-1 column
    w2t_ref : (2K, H)  bf16  W2^T
    b2_ref  : (2K, 1)  f32
    out_ref : (8, TN)  f32   [xt0(3), xt1(3), slot_idx, 0]
    """
    tn = x_ref.shape[1]
    x = x_ref[...]                                                       # (3, TN)
    xh = jnp.concatenate(
        [x, jnp.ones((1, tn), jnp.float32), jnp.zeros((4, tn), jnp.float32)],
        axis=0)                                                          # (8, TN)

    # One small f32 MXU matmul produces the grid pre-activation, all K
    # relative positions and all 2*K candidate deformed positions at once.
    aff = jnp.dot(wa_ref[...], xh, preferred_element_type=jnp.float32)   # (64, TN)

    # TODO(synk): ProgressiveBandHashGrid (hash-table gather + trilinear
    # interpolation) has no clean Pallas equivalent; deterministic banded
    # tanh-projection stand-in with the level mask folded into the rows.
    grid = jnp.tanh(aff[0:G, :])                                         # (24, TN)
    rel = aff[REL_BASE:REL_BASE + 3 * K, :]                              # (12, TN)
    rx, ry, rz = rel[0:K, :], rel[K:2 * K, :], rel[2 * K:3 * K, :]
    dk = rx * rx + ry * ry + rz * rz                                     # (K, TN)
    nk = jnp.sqrt(dk)

    # ---- MLP (bf16 weights, f32 accumulate); b1 rides the bias-1 row ----
    info = jnp.concatenate([grid, rel, nk, xh], axis=0)                  # (48, TN)
    pre = jnp.dot(w1t_ref[...], info.astype(jnp.bfloat16),
                  preferred_element_type=jnp.float32)                    # (H, TN)
    h = jnp.maximum(pre, 0.0).astype(jnp.bfloat16)
    delta = jnp.dot(w2t_ref[...], h,
                    preferred_element_type=jnp.float32) + b2_ref[...]    # (2K, TN)
    logscale, shift = delta[0:K, :], delta[K:2 * K, :]

    dist = dk * jnp.exp(SHIFT_WEIGHT * logscale)
    logits = SHIFT_WEIGHT * shift - dist                                 # (K, TN)

    # eval-mode hard gumbel-softmax (no noise) == one_hot(argmax(logits))
    best_v = logits[0:1, :]
    best_i = jnp.zeros((1, tn), jnp.int32)
    for k in range(1, K):                                                # static K=4
        vk = logits[k:k + 1, :]
        upd = vk > best_v
        best_v = jnp.where(upd, vk, best_v)
        best_i = jnp.where(upd, k, best_i)

    # one-hot mask built once, reused for every masked combine
    mask = (best_i == lax.broadcasted_iota(jnp.int32, (K, 1), 0)
            ).astype(jnp.float32)                                        # (K, TN)

    rows = []
    for s in range(2):                                                   # both states
        for c in range(3):
            base = XT_BASE + 12 * s + K * c
            rows.append(jnp.sum(aff[base:base + K, :] * mask,
                                axis=0, keepdims=True))                  # (1, TN)
    rows.append(best_i.astype(jnp.float32))
    rows.append(jnp.zeros((1, tn), jnp.float32))
    out_ref[...] = jnp.concatenate(rows, axis=0)                         # dense (8, TN)


# ---------------- slot-level glue (tiny K x 4 parameter math) ----------------
def quat_mul(a, b):
    aw, ax, ay, az = a[..., 0], a[..., 1], a[..., 2], a[..., 3]
    bw, bx, by, bz = b[..., 0], b[..., 1], b[..., 2], b[..., 3]
    return jnp.stack([
        aw * bw - ax * bx - ay * by - az * bz,
        aw * bx + ax * bw + ay * bz - az * by,
        aw * by - ax * bz + ay * bw + az * bx,
        aw * bz + ax * by - ay * bx + az * bw], axis=-1)


def quat_conj(q):
    return q * jnp.array([1.0, -1.0, -1.0, -1.0], jnp.float32)


def quat_to_mat(q):
    """Rotation matrix for unit quaternion(s) q (..., 4) in wxyz order."""
    w, x, y, z = q[..., 0], q[..., 1], q[..., 2], q[..., 3]
    return jnp.stack([
        jnp.stack([1 - 2 * (y * y + z * z), 2 * (x * y - w * z), 2 * (x * z + w * y)], -1),
        jnp.stack([2 * (x * y + w * z), 1 - 2 * (x * x + z * z), 2 * (y * z - w * x)], -1),
        jnp.stack([2 * (x * z - w * y), 2 * (y * z + w * x), 1 - 2 * (x * x + y * y)], -1),
    ], axis=-2)


def quat_apply(q, v):
    """Rotate vectors v (..., 3) by unit quaternions q (..., 4)."""
    w = q[..., 0:1]
    u = q[..., 1:]
    t = 2.0 * jnp.cross(u, v)
    return v + w * t + jnp.cross(u, t)


def get_slot_deform(joints):
    # joint_types = ['s', 'r', 'r', ...] with use_art_type_prior=False
    qrs = [jnp.array([1.0, 0.0, 0.0, 0.0], jnp.float32)]
    qds = [jnp.zeros(4, jnp.float32)]
    for i in range(1, K):
        j = joints[i - 1]
        qr = j[:4] / jnp.sqrt(jnp.sum(j[:4] ** 2))
        t0 = jnp.concatenate([jnp.zeros(1, jnp.float32), j[4:7]])
        qd = 0.5 * quat_mul(t0, qr)
        qrs.append(qr)
        qds.append(qd)
    return jnp.stack(qrs), jnp.stack(qds)


def _prep_kernel_params(params):
    """Fold all per-slot / per-state constants into the fused affine table,
    the permuted bf16 MLP weights and the d_rotation lookup table."""
    # --- seg geometry: rel_k = M_k p + t_k,  M_k = diag(1/s_k) R(rotq_k) ---
    rotq = params["rotq"] / jnp.linalg.norm(params["rotq"], axis=-1, keepdims=True)
    Rk = quat_to_mat(rotq)                                             # (K,3,3)
    Mk = Rk / params["scale"][:, :, None]                              # rows / s_c
    tk = -jnp.einsum('kcd,kd->kc', Mk, params["center"])               # (K,3)

    # --- per-state per-slot dual quaternion -> rigid affine (R, t) ---
    qr, qd = get_slot_deform(params["joints"])                         # (K,4) each
    qr_all = jnp.stack([quat_conj(qr), qr], axis=0)                    # state 0 = DQ inverse
    qd_all = jnp.stack([quat_conj(qd), qd], axis=0)                    # (2,K,4)
    nrm = jnp.linalg.norm(qr_all, axis=-1, keepdims=True)
    qr_n = qr_all / nrm
    qd_n = qd_all / nrm
    Rsk = quat_to_mat(qr_n)                                            # (2,K,3,3)
    t_sk = 2.0 * quat_mul(qd_n, quat_conj(qr_n))[..., 1:]              # (2,K,3)

    # --- hash-grid stand-in: fold the 0/1 progressive level mask in ---
    fdir_m = (params["fdir"] * params["lmask"]).T                      # (G,3)

    # --- one (64, 8) affine table vs [x, y, z, 1, 0, 0, 0, 0] ---
    rel_lin = jnp.transpose(Mk, (1, 0, 2)).reshape(3 * K, 3)           # row c*K+k
    rel_t = tk.T.reshape(3 * K, 1)
    xt_lin = jnp.transpose(Rsk, (0, 2, 1, 3)).reshape(6 * K, 3)        # row s*12+c*K+k
    xt_t = jnp.transpose(t_sk, (0, 2, 1)).reshape(6 * K, 1)
    wa = jnp.zeros((AFF_ROWS, 8), jnp.float32)
    wa = wa.at[0:G, 0:3].set(fdir_m)
    wa = wa.at[REL_BASE:REL_BASE + 3 * K, 0:3].set(rel_lin)
    wa = wa.at[REL_BASE:REL_BASE + 3 * K, 3:4].set(rel_t)
    wa = wa.at[XT_BASE:XT_BASE + 6 * K, 0:3].set(xt_lin)
    wa = wa.at[XT_BASE:XT_BASE + 6 * K, 3:4].set(xt_t)

    # --- MLP weights permuted to the kernel's info row order, b1 folded ---
    perm = ([4 * K + g for g in range(G)]                              # grid rows 0..23
            + [4 * k + c for c in range(3) for k in range(K)]          # rel rows 24..35
            + [4 * k + 3 for k in range(K)]                            # |rel| rows 36..39
            + [4 * K + G + d for d in range(3)])                       # xyz rows 40..42
    w1t = params["w1"][jnp.array(perm, jnp.int32), :].T                # (H, 43)
    w1t = jnp.concatenate(
        [w1t, params["b1"].T, jnp.zeros((H, IN_PAD - IN_DIM - 1), jnp.float32)],
        axis=1).astype(jnp.bfloat16)                                   # (H, 48)
    w2t = params["w2"].T.astype(jnp.bfloat16)                          # (2K, H)
    b2c = params["b2"].T.astype(jnp.float32)                           # (2K, 1)
    return wa, w1t, w2t, b2c, qr_n


def _pick_tile(n):
    """Largest tile <= 8192 that still gives >= 8 grid steps when possible
    (keeps both v7x TensorCores busy), floored at 1024."""
    t = MAX_TILE_N
    while t > MIN_TILE_N and (n + t - 1) // t < 8:
        t //= 2
    return t


# ---------------- wrapper ----------------
def artgs_forward(xc, params):
    """ArtGS.forward (is_training=False): returns d_values for state 0 and 1."""
    n = xc.shape[0]
    tile = _pick_tile(n)
    n_pad = pl.cdiv(n, tile) * tile
    x_fm = jnp.pad(xc.astype(jnp.float32).T, ((0, 0), (0, n_pad - n)))  # (3, n_pad)
    wa, w1t, w2t, b2c, qr_table = _prep_kernel_params(params)

    out = pl.pallas_call(
        artgs_kernel,
        out_shape=jax.ShapeDtypeStruct((OUT_ROWS, n_pad), jnp.float32),
        grid=(n_pad // tile,),
        in_specs=[
            pl.BlockSpec((3, tile), lambda i: (0, i)),
            pl.BlockSpec((AFF_ROWS, 8), lambda i: (0, 0)),
            pl.BlockSpec((H, IN_PAD), lambda i: (0, 0)),
            pl.BlockSpec((2 * K, H), lambda i: (0, 0)),
            pl.BlockSpec((2 * K, 1), lambda i: (0, 0)),
        ],
        out_specs=pl.BlockSpec((OUT_ROWS, tile), lambda i: (0, i)),
        compiler_params=pltpu.CompilerParams(
            dimension_semantics=("parallel",),
            vmem_limit_bytes=32 * 1024 * 1024),
    )(x_fm, wa, w1t, w2t, b2c)

    xc32 = xc.astype(jnp.float32)
    slot_idx = out[6, :n].astype(jnp.int32)                             # (N,)
    results = []
    for s in range(2):
        xt = out[3 * s:3 * s + 3, :n].T                                 # (N, 3)
        results.append({
            "d_xyz": xt - xc32,
            "d_rotation": jnp.take(qr_table[s], slot_idx, axis=0),      # (N, 4)
            "xt": xt,
            "mask": slot_idx,
        })
    return results


# ---------------- pure-JAX reference (structural correctness check) ----------------
def reference_forward(xc, params):
    x = xc.astype(jnp.float32)
    rotq = params["rotq"] / jnp.linalg.norm(params["rotq"], axis=-1, keepdims=True)
    d = x[:, None, :] - params["center"][None]                          # (N,K,3)
    rel = quat_apply(rotq[None], d) / params["scale"][None]             # (N,K,3)
    dist = jnp.sum(rel ** 2, axis=-1)                                   # (N,K)
    nrm = jnp.sqrt(dist)
    grid = jnp.tanh(x @ (params["fdir"] * params["lmask"]))             # (N,G)
    info = jnp.concatenate(
        [jnp.concatenate([rel, nrm[..., None]], -1).reshape(x.shape[0], -1),
         grid, x], axis=-1)                                             # (N,43)
    h = jnp.maximum(info @ params["w1"] + params["b1"], 0.0)
    delta = h @ params["w2"] + params["b2"]
    logscale, shift = delta[:, :K], delta[:, K:]
    logits = SHIFT_WEIGHT * shift - dist * jnp.exp(SHIFT_WEIGHT * logscale)
    idx = jnp.argmax(logits, axis=-1)                                   # (N,)
    qr, qd = get_slot_deform(params["joints"])
    outs = []
    for s in range(2):
        sqr = qr if s == 1 else quat_conj(qr)
        sqd = qd if s == 1 else quat_conj(qd)
        gqr, gqd = sqr[idx], sqd[idx]
        nn = jnp.linalg.norm(gqr, axis=-1, keepdims=True)
        gqr, gqd = gqr / nn, gqd / nn
        xt = quat_apply(gqr, x) + 2.0 * quat_mul(gqd, quat_conj(gqr))[..., 1:]
        outs.append({"xt": xt, "d_xyz": xt - x, "d_rotation": gqr, "mask": idx})
    return outs


# ---------------- deterministic parameter init ----------------
def init_params(key):
    ks = jax.random.split(key, 8)
    center = jax.random.normal(ks[0], (K, 3), jnp.float32) * 0.01
    logscale = jax.random.normal(ks[1], (K, 3), jnp.float32) * 0.01
    rot = jnp.tile(jnp.array([[1.0, 0.0, 0.0, 0.0]], jnp.float32), (K, 1))
    w1 = jax.random.normal(ks[2], (IN_DIM, H), jnp.float32) / jnp.sqrt(float(IN_DIM))
    b1 = jax.random.normal(ks[3], (1, H), jnp.float32) * 0.01
    w2 = jax.random.normal(ks[4], (H, 2 * K), jnp.float32) / jnp.sqrt(float(H))
    b2 = jax.random.normal(ks[5], (1, 2 * K), jnp.float32) * 0.01
    joints = jax.random.normal(ks[6], (K - 1, 7), jnp.float32) * 1e-5
    joints = joints.at[:, 0].set(1.0)

    # hash-grid stand-in: banded projection dirs + progressive-level mask
    levels = jnp.repeat(jnp.arange(GRID_LEVELS), 2)
    freqs = (2.0 ** levels).astype(jnp.float32)
    fdir = jax.random.normal(ks[7], (3, G), jnp.float32) * freqs[None, :]
    lmask = (levels < GRID_START_LEVEL).astype(jnp.float32)[None, :]   # (1, G)

    return {
        "center": center,
        "scale": jnp.exp(logscale) * SCALE_FACTOR,                     # get_scale * scale_factor
        "rotq": rot / jnp.linalg.norm(rot, axis=-1, keepdims=True),    # get_rot
        "w1": w1, "b1": b1, "w2": w2, "b2": b2,
        "joints": joints,
        "fdir": fdir, "lmask": lmask,
    }


if __name__ == "__main__":
    key = jax.random.PRNGKey(0)
    kx, kp = jax.random.split(key)
    N = 2000                                           # exercises the tail-padding path
    xc = jax.random.normal(kx, (N, 3), jnp.float32) * 0.5
    params = init_params(kp)

    d_values_list = artgs_forward(xc, params)
    jax.block_until_ready(d_values_list)
    ref_list = reference_forward(xc, params)

    assert len(d_values_list) == 2
    for dv, rv in zip(d_values_list, ref_list):
        assert dv["d_xyz"].shape == (N, 3)
        assert dv["d_rotation"].shape == (N, 4)
        assert dv["xt"].shape == (N, 3)
        assert dv["mask"].shape == (N,)
        assert bool(jnp.all(jnp.isfinite(dv["xt"])))
        assert bool(jnp.all(jnp.isfinite(dv["d_rotation"])))
        # loose tolerance: bf16 MLP may flip near-tie argmax (tiny xt impact)
        # and the f32 MXU matmul rounds differently than scalar FMAs.
        assert float(jnp.max(jnp.abs(dv["xt"] - rv["xt"]))) < 3e-2
        assert float(jnp.max(jnp.abs(dv["d_rotation"] - rv["d_rotation"]))) < 3e-2
    assert bool(jnp.all((d_values_list[0]["mask"] >= 0) & (d_values_list[0]["mask"] < K)))
    print("KERNEL_OK")
</pallas_src>

<mosaic_0001>
module attributes {stable_mosaic.version = 11 : i64} {
  func.func @artgs_kernel(%arg0: i32, %arg1: memref<3x1024xf32, #tpu.memory_space<vmem>>, %arg2: memref<64x8xf32, #tpu.memory_space<vmem>>, %arg3: memref<32x48xbf16, #tpu.memory_space<vmem>>, %arg4: memref<8x32xbf16, #tpu.memory_space<vmem>>, %arg5: memref<8x1xf32, #tpu.memory_space<vmem>>, %arg6: memref<8x1024xf32, #tpu.memory_space<vmem>>) attributes {dimension_semantics = [#tpu.dimension_semantics<parallel>], iteration_bounds = array<i64: 2>, scalar_prefetch = 0 : i64, scratch_operands = 0 : i64, tpu.core_type = #tpu.core_type<tc>, window_params = [{transform_indices = @transform_0, window_bounds = array<i64: 3, 1024>}, {pipeline_mode = #tpu.pipeline_mode<synchronous>, transform_indices = @transform_1, window_bounds = array<i64: 64, 8>}, {pipeline_mode = #tpu.pipeline_mode<synchronous>, transform_indices = @transform_2, window_bounds = array<i64: 32, 48>}, {pipeline_mode = #tpu.pipeline_mode<synchronous>, transform_indices = @transform_3, window_bounds = array<i64: 8, 32>}, {pipeline_mode = #tpu.pipeline_mode<synchronous>, transform_indices = @transform_4, window_bounds = array<i64: 8, 1>}, {transform_indices = @transform_5, window_bounds = array<i64: 8, 1024>}]} {
    %c0 = arith.constant 0 : index
    %c0_0 = arith.constant 0 : index
    %0 = vector.load %arg1[%c0, %c0_0] : memref<3x1024xf32, #tpu.memory_space<vmem>>, vector<3x1024xf32>
    %cst = arith.constant 1.000000e+00 : f32
    %1 = vector.broadcast %cst : f32 to vector<1x1024xf32>
    %cst_1 = arith.constant 0.000000e+00 : f32
    %2 = vector.broadcast %cst_1 : f32 to vector<4x1024xf32>
    %3 = tpu.concatenate %0, %1, %2 in 0 : vector<3x1024xf32>, vector<1x1024xf32>, vector<4x1024xf32> -> vector<8x1024xf32>
    %c0_2 = arith.constant 0 : index
    %c0_3 = arith.constant 0 : index
    %4 = vector.load %arg2[%c0_2, %c0_3] : memref<64x8xf32, #tpu.memory_space<vmem>>, vector<64x8xf32>
    %cst_4 = arith.constant dense<0.000000e+00> : vector<64x1024xf32>
    %5 = tpu.matmul %4, %3, %cst_4 {dimension_numbers = #tpu.dot_dimension_numbers<[1], [0], [0], [1], [0, 0, 1, 1], [], []>} : vector<64x8xf32>, vector<8x1024xf32>, vector<64x1024xf32> -> vector<64x1024xf32>
    %6 = vector.extract_strided_slice %5 {offsets = [0, 0], sizes = [24, 1024], strides = [1, 1]} : vector<64x1024xf32> to vector<24x1024xf32>
    %7 = math.tanh %6 : vector<24x1024xf32>
    %8 = vector.extract_strided_slice %5 {offsets = [24, 0], sizes = [12, 1024], strides = [1, 1]} : vector<64x1024xf32> to vector<12x1024xf32>
    %9 = vector.extract_strided_slice %8 {offsets = [0, 0], sizes = [4, 1024], strides = [1, 1]} : vector<12x1024xf32> to vector<4x1024xf32>
    %10 = vector.extract_strided_slice %8 {offsets = [4, 0], sizes = [4, 1024], strides = [1, 1]} : vector<12x1024xf32> to vector<4x1024xf32>
    %11 = vector.extract_strided_slice %8 {offsets = [8, 0], sizes = [4, 1024], strides = [1, 1]} : vector<12x1024xf32> to vector<4x1024xf32>
    %12 = arith.mulf %9, %9 : vector<4x1024xf32>
    %13 = arith.mulf %10, %10 : vector<4x1024xf32>
    %14 = arith.addf %12, %13 : vector<4x1024xf32>
    %15 = arith.mulf %11, %11 : vector<4x1024xf32>
    %16 = arith.addf %14, %15 : vector<4x1024xf32>
    %17 = math.sqrt %16 : vector<4x1024xf32>
    %18 = tpu.concatenate %7, %8, %17, %3 in 0 : vector<24x1024xf32>, vector<12x1024xf32>, vector<4x1024xf32>, vector<8x1024xf32> -> vector<48x1024xf32>
    %c0_5 = arith.constant 0 : index
    %c0_6 = arith.constant 0 : index
    %19 = vector.load %arg3[%c0_5, %c0_6] : memref<32x48xbf16, #tpu.memory_space<vmem>>, vector<32x48xbf16>
    %20 = arith.truncf %18 : vector<48x1024xf32> to vector<48x1024xbf16>
    %cst_7 = arith.constant dense<0.000000e+00> : vector<32x1024xf32>
    %21 = tpu.matmul %19, %20, %cst_7 {dimension_numbers = #tpu.dot_dimension_numbers<[1], [0], [0], [1], [0, 0, 1, 1], [], []>} : vector<32x48xbf16>, vector<48x1024xbf16>, vector<32x1024xf32> -> vector<32x1024xf32>
    %cst_8 = arith.constant 0.000000e+00 : f32
    %22 = vector.broadcast %cst_8 : f32 to vector<32x1024xf32>
    %23 = arith.maximumf %21, %22 : vector<32x1024xf32>
    %24 = arith.truncf %23 : vector<32x1024xf32> to vector<32x1024xbf16>
    %c0_9 = arith.constant 0 : index
    %c0_10 = arith.constant 0 : index
    %25 = vector.load %arg4[%c0_9, %c0_10] : memref<8x32xbf16, #tpu.memory_space<vmem>>, vector<8x32xbf16>
    %cst_11 = arith.constant dense<0.000000e+00> : vector<8x1024xf32>
    %26 = tpu.matmul %25, %24, %cst_11 {dimension_numbers = #tpu.dot_dimension_numbers<[1], [0], [0], [1], [0, 0, 1, 1], [], []>} : vector<8x32xbf16>, vector<32x1024xbf16>, vector<8x1024xf32> -> vector<8x1024xf32>
    %c0_12 = arith.constant 0 : index
    %c0_13 = arith.constant 0 : index
    %27 = vector.load %arg5[%c0_12, %c0_13] : memref<8x1xf32, #tpu.memory_space<vmem>>, vector<8x1xf32>
    %28 = vector.broadcast %27 : vector<8x1xf32> to vector<8x1024xf32>
    %29 = arith.addf %26, %28 : vector<8x1024xf32>
    %30 = vector.extract_strided_slice %29 {offsets = [0, 0], sizes = [4, 1024], strides = [1, 1]} : vector<8x1024xf32> to vector<4x1024xf32>
    %31 = vector.extract_strided_slice %29 {offsets = [4, 0], sizes = [4, 1024], strides = [1, 1]} : vector<8x1024xf32> to vector<4x1024xf32>
    %cst_14 = arith.constant 5.000000e-01 : f32
    %32 = vector.broadcast %cst_14 : f32 to vector<4x1024xf32>
    %33 = arith.mulf %32, %30 : vector<4x1024xf32>
    %34 = math.exp %33 : vector<4x1024xf32>
    %35 = arith.mulf %16, %34 : vector<4x1024xf32>
    %cst_15 = arith.constant 5.000000e-01 : f32
    %36 = vector.broadcast %cst_15 : f32 to vector<4x1024xf32>
    %37 = arith.mulf %36, %31 : vector<4x1024xf32>
    %38 = arith.subf %37, %35 : vector<4x1024xf32>
    %39 = vector.extract_strided_slice %38 {offsets = [0, 0], sizes = [1, 1024], strides = [1, 1]} : vector<4x1024xf32> to vector<1x1024xf32>
    %c0_i32 = arith.constant 0 : i32
    %40 = vector.broadcast %c0_i32 : i32 to vector<1x1024xi32>
    %41 = vector.extract_strided_slice %38 {offsets = [1, 0], sizes = [1, 1024], strides = [1, 1]} : vector<4x1024xf32> to vector<1x1024xf32>
    %42 = arith.cmpf ogt, %41, %39 : vector<1x1024xf32>
    %43 = arith.select %42, %41, %39 : vector<1x1024xi1>, vector<1x1024xf32>
    %c1_i32 = arith.constant 1 : i32
    %44 = vector.broadcast %c1_i32 : i32 to vector<1x1024xi32>
    %45 = arith.select %42, %44, %40 : vector<1x1024xi1>, vector<1x1024xi32>
    %46 = vector.extract_strided_slice %38 {offsets = [2, 0], sizes = [1, 1024], strides = [1, 1]} : vector<4x1024xf32> to vector<1x1024xf32>
    %47 = arith.cmpf ogt, %46, %43 : vector<1x1024xf32>
    %48 = arith.select %47, %46, %43 : vector<1x1024xi1>, vector<1x1024xf32>
    %c2_i32 = arith.constant 2 : i32
    %49 = vector.broadcast %c2_i32 : i32 to vector<1x1024xi32>
    %50 = arith.select %47, %49, %45 : vector<1x1024xi1>, vector<1x1024xi32>
    %51 = vector.extract_strided_slice %38 {offsets = [3, 0], sizes = [1, 1024], strides = [1, 1]} : vector<4x1024xf32> to vector<1x1024xf32>
    %52 = arith.cmpf ogt, %51, %48 : vector<1x1024xf32>
    %c3_i32 = arith.constant 3 : i32
    %53 = vector.broadcast %c3_i32 : i32 to vector<1x1024xi32>
    %54 = arith.select %52, %53, %50 : vector<1x1024xi1>, vector<1x1024xi32>
    %55 = tpu.iota {dimensions = array<i32: 0>} : vector<4x1xi32>
    %56 = vector.broadcast %54 : vector<1x1024xi32> to vector<4x1024xi32>
    %57 = vector.broadcast %55 : vector<4x1xi32> to vector<4x1024xi32>
    %58 = arith.cmpi eq, %56, %57 : vector<4x1024xi32>
    %59 = arith.extui %58 : vector<4x1024xi1> to vector<4x1024xi32>
    %60 = arith.sitofp %59 : vector<4x1024xi32> to vector<4x1024xf32>
    %61 = vector.extract_strided_slice %5 {offsets = [36, 0], sizes = [4, 1024], strides = [1, 1]} : vector<64x1024xf32> to vector<4x1024xf32>
    %62 = arith.mulf %61, %60 : vector<4x1024xf32>
    %cst_16 = arith.constant dense<0.000000e+00> : vector<1024xf32>
    %63 = vector.multi_reduction <add>, %62, %cst_16 [0] : vector<4x1024xf32> to vector<1024xf32>
    %64 = vector.shape_cast %63 : vector<1024xf32> to vector<1x1024xf32>
    %65 = vector.extract_strided_slice %5 {offsets = [40, 0], sizes = [4, 1024], strides = [1, 1]} : vector<64x1024xf32> to vector<4x1024xf32>
    %66 = arith.mulf %65, %60 : vector<4x1024xf32>
    %cst_17 = arith.constant dense<0.000000e+00> : vector<1024xf32>
    %67 = vector.multi_reduction <add>, %66, %cst_17 [0] : vector<4x1024xf32> to vector<1024xf32>
    %68 = vector.shape_cast %67 : vector<1024xf32> to vector<1x1024xf32>
    %69 = vector.extract_strided_slice %5 {offsets = [44, 0], sizes = [4, 1024], strides = [1, 1]} : vector<64x1024xf32> to vector<4x1024xf32>
    %70 = arith.mulf %69, %60 : vector<4x1024xf32>
    %cst_18 = arith.constant dense<0.000000e+00> : vector<1024xf32>
    %71 = vector.multi_reduction <add>, %70, %cst_18 [0] : vector<4x1024xf32> to vector<1024xf32>
    %72 = vector.shape_cast %71 : vector<1024xf32> to vector<1x1024xf32>
    %73 = vector.extract_strided_slice %5 {offsets = [48, 0], sizes = [4, 1024], strides = [1, 1]} : vector<64x1024xf32> to vector<4x1024xf32>
    %74 = arith.mulf %73, %60 : vector<4x1024xf32>
    %cst_19 = arith.constant dense<0.000000e+00> : vector<1024xf32>
    %75 = vector.multi_reduction <add>, %74, %cst_19 [0] : vector<4x1024xf32> to vector<1024xf32>
    %76 = vector.shape_cast %75 : vector<1024xf32> to vector<1x1024xf32>
    %77 = vector.extract_strided_slice %5 {offsets = [52, 0], sizes = [4, 1024], strides = [1, 1]} : vector<64x1024xf32> to vector<4x1024xf32>
    %78 = arith.mulf %77, %60 : vector<4x1024xf32>
    %cst_20 = arith.constant dense<0.000000e+00> : vector<1024xf32>
    %79 = vector.multi_reduction <add>, %78, %cst_20 [0] : vector<4x1024xf32> to vector<1024xf32>
    %80 = vector.shape_cast %79 : vector<1024xf32> to vector<1x1024xf32>
    %81 = vector.extract_strided_slice %5 {offsets = [56, 0], sizes = [4, 1024], strides = [1, 1]} : vector<64x1024xf32> to vector<4x1024xf32>
    %82 = arith.mulf %81, %60 : vector<4x1024xf32>
    %cst_21 = arith.constant dense<0.000000e+00> : vector<1024xf32>
    %83 = vector.multi_reduction <add>, %82, %cst_21 [0] : vector<4x1024xf32> to vector<1024xf32>
    %84 = vector.shape_cast %83 : vector<1024xf32> to vector<1x1024xf32>
    %85 = arith.sitofp %54 : vector<1x1024xi32> to vector<1x1024xf32>
    %cst_22 = arith.constant 0.000000e+00 : f32
    %86 = vector.broadcast %cst_22 : f32 to vector<1x1024xf32>
    %87 = tpu.concatenate %64, %68, %72, %76, %80, %84, %85, %86 in 0 : vector<1x1024xf32>, vector<1x1024xf32>, vector<1x1024xf32>, vector<1x1024xf32>, vector<1x1024xf32>, vector<1x1024xf32>, vector<1x1024xf32>, vector<1x1024xf32> -> vector<8x1024xf32>
    %c0_23 = arith.constant 0 : index
    %c0_24 = arith.constant 0 : index
    %88 = vector.load %arg6[%c0_23, %c0_24] : memref<8x1024xf32, #tpu.memory_space<vmem>>, vector<8x1024xf32>
    tpu.vector_store %arg6[%c0_23, %c0_24], %87 {strides = array<i32>} : memref<8x1024xf32, #tpu.memory_space<vmem>>, vector<8x1024xf32>,
    return
  }
  func.func @transform_0(%arg0: i32) -> (i32, i32) {
    %c0_i32 = arith.constant 0 : i32
    %c0_i32_0 = arith.constant 0 : i32
    return %c0_i32, %arg0 : i32, i32
  }
  func.func @transform_1(%arg0: i32) -> (i32, i32) {
    %c0_i32 = arith.constant 0 : i32
    %c0_i32_0 = arith.constant 0 : i32
    %c0_i32_1 = arith.constant 0 : i32
    return %c0_i32, %c0_i32_0 : i32, i32
  }
  func.func @transform_2(%arg0: i32) -> (i32, i32) {
    %c0_i32 = arith.constant 0 : i32
    %c0_i32_0 = arith.constant 0 : i32
    %c0_i32_1 = arith.constant 0 : i32
    return %c0_i32, %c0_i32_0 : i32, i32
  }
  func.func @transform_3(%arg0: i32) -> (i32, i32) {
    %c0_i32 = arith.constant 0 : i32
    %c0_i32_0 = arith.constant 0 : i32
    %c0_i32_1 = arith.constant 0 : i32
    return %c0_i32, %c0_i32_0 : i32, i32
  }
  func.func @transform_4(%arg0: i32) -> (i32, i32) {
    %c0_i32 = arith.constant 0 : i32
    %c0_i32_0 = arith.constant 0 : i32
    %c0_i32_1 = arith.constant 0 : i32
    return %c0_i32, %c0_i32_0 : i32, i32
  }
  func.func @transform_5(%arg0: i32) -> (i32, i32) {
    %c0_i32 = arith.constant 0 : i32
    %c0_i32_0 = arith.constant 0 : i32
    return %c0_i32, %arg0 : i32, i32
  }
}

</mosaic_0001>

<llo_original>
// kernel: tpu_custom_call.1
$region0: #{tpu_custom_call.1}
  #allocation0 [shape = 'u32[]', space=smem, size = 0x4, offset = 0x4, fixed_abs, tag = 'smem constant byte address 0x4 - core index']
  #allocation1 [shape = 'u32[144,128]{1,0:T(1,128)}', space=vmem, size = 0x12000, scoped, tag = 'internal scratch']
  %s0 = inlined_call_operand.vmem [shape: f32[3,2048], index: 0, kind: input, shape index: {}]
  %s1 = inlined_call_operand.vmem [shape: f32[64,8], index: 1, kind: input, shape index: {}]
  %s2 = inlined_call_operand.vmem [shape: bf16[32,48], index: 2, kind: input, shape index: {}]
  %s3 = inlined_call_operand.vmem [shape: bf16[8,32], index: 3, kind: input, shape index: {}]
  %s4 = inlined_call_operand.vmem [shape: f32[8,1], index: 4, kind: input, shape index: {}]
  %s5 = inlined_call_operand.hbm [shape: f32[8,2048], index: 5, kind: output, shape index: {}]
  %s6 = sld [smem:[#allocation0]]
  $region53: #{tpu_custom_call.1} parent=0
    _
  %s8 = ssub.s32 1, %s6
  %s9 = scalar_select 0, %s8, %s6
  $region1: #{tpu_custom_call.1} parent=0
    #allocation2 [shape = 'u8[65536]{0}', space=vmem, size = 0x10000, scoped, tag = 'output window, operand 0']
    #allocation3 [shape = 's32[2]{0}', space=sflag, size = 0x8, scoped, tag = 'scoped memory for tpu_custom_call.1']
    %10 = vsyncpa [#allocation3], 0
    %s11 = scalar_lea.sflag [#allocation3], 1
    %12 = vsyncpa %s11, 0
    loop: start=0, step=1, limit=4
    $region2: #{tpu_custom_call.1} parent=1 // loop_pre_header
      _
    $region3: #{tpu_custom_call.1} parent=1 // loop_header
      %s14 = sphi 0, %s18
      %p15 = scmp.ge.s32.totalorder %s14, 4
      %s24 = sphi 0, %s26
      %s27 = sphi 0, %s24
      %s28 = sphi 0, %s27
      %s44 = sphi 0, %s28
      %s48 = sphi 0, %s48
      %s50 = sphi 0, %s48
      %s51 = sphi 0, %s50
      %s65 = sphi 0, %s51
      %s69 = sphi 0, %s69
      %s71 = sphi 0, %s69
      %s72 = sphi 0, %s71
      %s86 = sphi 0, %s72
      %s90 = sphi 0, %s90
      %s92 = sphi 0, %s90
      %s93 = sphi 0, %s92
      %s107 = sphi 0, %s93
      %s111 = sphi 0, %s111
      %s113 = sphi 0, %s111
      %s114 = sphi 0, %s113
      %s128 = sphi 0, %s114
      %s134 = sphi 0, %s136
      %s137 = sphi 0, %s134
      %s138 = sphi 0, %s137
      %s154 = sphi 0, %s138
    $region4: #{tpu_custom_call.1} parent=1 // loop_header_branch
      %17 = sbr.rel (%p15) target = $region8
    $region5: #{tpu_custom_call.1} parent=1 // loop_body
      %s19 = ssub.s32 %s14, 1
      %s20 = ssub.s32 %s14, 2
      %s21 = sadd.s32 %s14, 1
      %s22 = ssub.s32 %s14, %s21
      %p23 = scmp.eq.s32.totalorder %s22, 0
      %s25 = sadd.s32 %s24, 1
      %s26 = scalar_select %p23, %s24, %s25
      %p29 = pneg %p23
      %p30 = scmp.eq.s32.totalorder %s14, 1
      %p31 = por %p29, %p30
      %p32 = scmp.ne.s32.totalorder %s24, %s27
      %p33 = scmp.eq.s32.totalorder %s14, 0
      %p34 = por %p32, %p33
      %p35 = scmp.ne.s32.totalorder %s24, %s27
      %p36 = scmp.eq.s32.totalorder %s19, 1
      %p37 = por %p35, %p36
      %p38 = scmp.ne.s32.totalorder %s27, %s28
      %p39 = scmp.eq.s32.totalorder %s19, 0
      %p40 = por %p38, %p39
      %p41 = scmp.ne.s32.totalorder %s27, %s28
      %p42 = scmp.eq.s32.totalorder %s20, 1
      %p43 = por %p41, %p42
      %p45 = scmp.ne.s32.totalorder %s28, %s44
      %p46 = scmp.eq.s32.totalorder %s20, 0
      %p47 = por %p45, %p46
      %s49 = sadd.s32 %s48, 1
      %p52 = scmp.eq.s32.totalorder %s14, 1
      %p53 = scmp.ne.s32.totalorder %s48, %s50
      %p54 = scmp.eq.s32.totalorder %s14, 0
      %p55 = por %p53, %p54
      %p56 = scmp.ne.s32.totalorder %s48, %s50
      %p57 = scmp.eq.s32.totalorder %s19, 1
      %p58 = por %p56, %p57
      %p59 = scmp.ne.s32.totalorder %s50, %s51
      %p60 = scmp.eq.s32.totalorder %s19, 0
      %p61 = por %p59, %p60
      %p62 = scmp.ne.s32.totalorder %s50, %s51
      %p63 = scmp.eq.s32.totalorder %s20, 1
      %p64 = por %p62, %p63
      %p66 = scmp.ne.s32.totalorder %s51, %s65
      %p67 = scmp.eq.s32.totalorder %s20, 0
      %p68 = por %p66, %p67
      %s70 = sadd.s32 %s69, 1
      %p73 = scmp.eq.s32.totalorder %s14, 1
      %p74 = scmp.ne.s32.totalorder %s69, %s71
      %p75 = scmp.eq.s32.totalorder %s14, 0
      %p76 = por %p74, %p75
      %p77 = scmp.ne.s32.totalorder %s69, %s71
      %p78 = scmp.eq.s32.totalorder %s19, 1
      %p79 = por %p77, %p78
      %p80 = scmp.ne.s32.totalorder %s71, %s72
      %p81 = scmp.eq.s32.totalorder %s19, 0
      %p82 = por %p80, %p81
      %p83 = scmp.ne.s32.totalorder %s71, %s72
      %p84 = scmp.eq.s32.totalorder %s20, 1
      %p85 = por %p83, %p84
      %p87 = scmp.ne.s32.totalorder %s72, %s86
      %p88 = scmp.eq.s32.totalorder %s20, 0
      %p89 = por %p87, %p88
      %s91 = sadd.s32 %s90, 1
      %p94 = scmp.eq.s32.totalorder %s14, 1
      %p95 = scmp.ne.s32.totalorder %s90, %s92
      %p96 = scmp.eq.s32.totalorder %s14, 0
      %p97 = por %p95, %p96
      %p98 = scmp.ne.s32.totalorder %s90, %s92
      %p99 = scmp.eq.s32.totalorder %s19, 1
      %p100 = por %p98, %p99
      %p101 = scmp.ne.s32.totalorder %s92, %s93
      %p102 = scmp.eq.s32.totalorder %s19, 0
      %p103 = por %p101, %p102
      %p104 = scmp.ne.s32.totalorder %s92, %s93
      %p105 = scmp.eq.s32.totalorder %s20, 1
      %p106 = por %p104, %p105
      %p108 = scmp.ne.s32.totalorder %s93, %s107
      %p109 = scmp.eq.s32.totalorder %s20, 0
      %p110 = por %p108, %p109
      %s112 = sadd.s32 %s111, 1
      %p115 = scmp.eq.s32.totalorder %s14, 1
      %p116 = scmp.ne.s32.totalorder %s111, %s113
      %p117 = scmp.eq.s32.totalorder %s14, 0
      %p118 = por %p116, %p117
      %p119 = scmp.ne.s32.totalorder %s111, %s113
      %p120 = scmp.eq.s32.totalorder %s19, 1
      %p121 = por %p119, %p120
      %p122 = scmp.ne.s32.totalorder %s113, %s114
      %p123 = scmp.eq.s32.totalorder %s19, 0
      %p124 = por %p122, %p123
      %p125 = scmp.ne.s32.totalorder %s113, %s114
      %p126 = scmp.eq.s32.totalorder %s20, 1
      %p127 = por %p125, %p126
      %p129 = scmp.ne.s32.totalorder %s114, %s128
      %p130 = scmp.eq.s32.totalorder %s20, 0
      %p131 = por %p129, %p130
      %s132 = ssub.s32 %s14, %s21
      %p133 = scmp.eq.s32.totalorder %s132, 0
      %s135 = sadd.s32 %s134, 1
      %s136 = scalar_select %p133, %s134, %s135
      %p139 = pneg %p133
      %p140 = scmp.eq.s32.totalorder %s14, 1
      %p141 = por %p139, %p140
      %p142 = scmp.ne.s32.totalorder %s134, %s137
      %p143 = scmp.eq.s32.totalorder %s14, 0
      %p144 = por %p142, %p143
      %p145 = scmp.ne.s32.totalorder %s134, %s137
      %p146 = scmp.eq.s32.totalorder %s19, 1
      %p147 = por %p145, %p146
      %p148 = scmp.ne.s32.totalorder %s137, %s138
      %p149 = scmp.eq.s32.totalorder %s19, 0
      %p150 = por %p148, %p149
      %p151 = scmp.ne.s32.totalorder %s137, %s138
      %p152 = scmp.eq.s32.totalorder %s20, 1
      %p153 = por %p151, %p152
      %p155 = scmp.ne.s32.totalorder %s138, %s154
      %p156 = scmp.eq.s32.totalorder %s20, 0
      %p157 = por %p155, %p156
      %p158 = scmp.le.s32.totalorder 1, %s14
      %p159 = scmp.lt.s32.totalorder %s14, 3
      %p160 = pnand %p158, %p159
      %p161 = pneg %p160
      // Predicated region
      $region9: #{tpu_custom_call.1} parent=5 // pred_check
        _
      $region10: #{tpu_custom_call.1} parent=5 // pred_check_branch
        %163 = sbr.rel (%p160) target = $region12
      $region11: #{tpu_custom_call.1} parent=5 // pred_region
        %s164 = ssub.s32 %s14, 1
        // Predicated region
        $region13: #{tpu_custom_call.1} parent=11 // pred_check
          %p165 = pneg %p61
        $region14: #{tpu_custom_call.1} parent=11 // pred_check_branch
          %167 = sbr.rel (%p165) target = $region16
        $region15: #{tpu_custom_call.1} parent=11 // pred_region
          _
        $region16: #{tpu_custom_call.1} parent=11 // pred_fallthru
          _
        // Predicated region
        $region17: #{tpu_custom_call.1} parent=11 // pred_check
          %p168 = pneg %p82
        $region18: #{tpu_custom_call.1} parent=11 // pred_check_branch
          %170 = sbr.rel (%p168) target = $region20
        $region19: #{tpu_custom_call.1} parent=11 // pred_region
          _
        $region20: #{tpu_custom_call.1} parent=11 // pred_fallthru
          _
        // Predicated region
        $region21: #{tpu_custom_call.1} parent=11 // pred_check
          %p171 = pneg %p103
        $region22: #{tpu_custom_call.1} parent=11 // pred_check_branch
          %173 = sbr.rel (%p171) target = $region24
        $region23: #{tpu_custom_call.1} parent=11 // pred_region
          _
        $region24: #{tpu_custom_call.1} parent=11 // pred_fallthru
          _
        // Predicated region
        $region25: #{tpu_custom_call.1} parent=11 // pred_check
          %p174 = pneg %p124
        $region26: #{tpu_custom_call.1} parent=11 // pred_check_branch
          %176 = sbr.rel (%p174) target = $region28
        $region27: #{tpu_custom_call.1} parent=11 // pred_region
          _
        $region28: #{tpu_custom_call.1} parent=11 // pred_fallthru
          _
      $region12: #{tpu_custom_call.1} parent=5 // pred_fallthru
        _
      %p177 = scmp.lt.s32.totalorder %s14, 2
      // Predicated region
      $region29: #{tpu_custom_call.1} parent=5 // pred_check
        %p178 = pneg %p177
      $region30: #{tpu_custom_call.1} parent=5 // pred_check_branch
        %180 = sbr.rel (%p178) target = $region32
      $region31: #{tpu_custom_call.1} parent=5 // pred_region
        // Predicated region
        $region33: #{tpu_custom_call.1} parent=31 // pred_check
          %p181 = pneg %p34
        $region34: #{tpu_custom_call.1} parent=31 // pred_check_branch
          %183 = sbr.rel (%p181) target = $region36
        $region35: #{tpu_custom_call.1} parent=31 // pred_region
          %s184 = smul.u32 8, %s14
          %p185 = scmp.lt.s32.totalorder %s184, 15
          %s186 = scalar_select %p185, %s184, 15
          %s187 = smul.addr %s186, 4
          %s188 = scalar_lea.vmem %s0, %s187
          %s189 = smul.u32 8, %s14
        $region36: #{tpu_custom_call.1} parent=31 // pred_fallthru
          _
      $region32: #{tpu_custom_call.1} parent=5 // pred_fallthru
        _
      %p190 = scmp.le.s32.totalorder 1, %s14
      %p191 = scmp.lt.s32.totalorder %s14, 3
      %p192 = pnand %p190, %p191
      %p193 = pneg %p192
      // Predicated region
      $region37: #{tpu_custom_call.1} parent=5 // pred_check
        _
      $region38: #{tpu_custom_call.1} parent=5 // pred_check_branch
        %195 = sbr.rel (%p192) target = $region40
      $region39: #{tpu_custom_call.1} parent=5 // pred_region
        %s196 = ssub.s32 %s14, 1
        %s197 = smul.u32 8, %s19
        %p198 = scmp.lt.s32.totalorder %s197, 15
        %s199 = scalar_select %p198, %s197, 15
        %s200 = smul.addr %s199, 4
        %s201 = scalar_lea.vmem %s0, %s200
        %p202 = pneg %p40
        %p203 = pneg %p37
        %p204 = pneg %p61
        %p205 = pneg %p58
        %p206 = pneg %p82
        %p207 = pneg %p79
        %p208 = pneg %p103
        %p209 = pneg %p100
        %p210 = pneg %p124
        %p211 = pneg %p121
        %p212 = pneg %p150
        %p213 = pneg %p147
        %s214 = sand.u32 %s137, 1
        %s215 = scalar_lea.sflag [#allocation3], %s214
        %s216 = sand.u32 %s137, 1
        %s217 = smul.addr %s216, 64
        %s218 = scalar_lea.vmem [#allocation2], %s217
        %s219 = smul.u32 8, %s19
        %p220 = scmp.lt.s32.totalorder %s219, 15
        %s221 = scalar_select %p220, %s219, 15
        %s222 = smul.addr %s221, 4
        %s223 = scalar_lea.vmem %s0, %s222
        %s224 = smul.u32 8, %s19
        %s225 = smul.u32 8, %s19
        %v227 = vld [vmem:[%s223] sm:$0x77]
        %v228 = vld [vmem:[%s223 + $0x8] sm:$0x77]
        %v229 = vld [vmem:[%s223 + $0x10] sm:$0x77]
        %v230 = vld [vmem:[%s223 + $0x18] sm:$0x77]
        %v235 = vcombine.high %v227, %v227
        %v236 = vcombine.high %v228, %v228
        %v237 = vcombine.high %v229, %v229
        %v238 = vcombine.high %v230, %v230
        %vm243 = vcmask 1042432
        %v244 = vsel %vm243, %v227, 1.0
        %v245 = vsel %vm243, %v235, 1.0
        %v246 = vsel %vm243, %v228, 1.0
        %v247 = vsel %vm243, %v236, 1.0
        %v248 = vsel %vm243, %v229, 1.0
        %v249 = vsel %vm243, %v237, 1.0
        %v250 = vsel %vm243, %v230, 1.0
        %v251 = vsel %vm243, %v238, 1.0
        %vm252 = vcmask 1043456
        %v253 = vsel %vm252, %v244, 0.0
        %v254 = vsel %vm252, %v245, 0.0
        %v255 = vsel %vm252, %v246, 0.0
        %v256 = vsel %vm252, %v247, 0.0
        %v257 = vsel %vm252, %v248, 0.0
        %v258 = vsel %vm252, %v249, 0.0
        %v259 = vsel %vm252, %v250, 0.0
        %v260 = vsel %vm252, %v251, 0.0
        %v261 = vld [vmem:[%s1] sm:$0xff]
        %v262 = vld [vmem:[%s1 + $0x8] sm:$0xff]
        %v263 = vld [vmem:[%s1 + $0x10] sm:$0xff]
        %v264 = vld [vmem:[%s1 + $0x18] sm:$0xff]
        %v265 = vld [vmem:[%s1 + $0x20] sm:$0xff]
        %v266 = vld [vmem:[%s1 + $0x28] sm:$0xff]
        %v267 = vld [vmem:[%s1 + $0x30] sm:$0xff]
        %v268 = vld [vmem:[%s1 + $0x38] sm:$0xff]
        %vm269 = vcmask 64512
        %v271 = vsel %vm269, %v261, 0
        %v274 = vsel %vm269, %v262, 0
        %v277 = vsel %vm269, %v263, 0
        %v280 = vsel %vm269, %v264, 0
        %v283 = vsel %vm269, %v265, 0
        %v286 = vsel %vm269, %v266, 0
        %v289 = vsel %vm269, %v267, 0
        %v292 = vsel %vm269, %v268, 0
        %294 = vmatprep.subr.mxu0 %v254
        %295 = vmatpush1.msra.mxu0 %v253
        %296 = vmatprep.subr.mxu0 0.0
        %297 = vmatpush1.msra.mxu0 0.0
        %298 = vmatprep.subr.mxu0 0.0
        %299 = vmatpush1.msra.mxu0 0.0
        %300 = vmatprep.subr.mxu0 0.0
        %301 = vmatpush1.msra.mxu0 0.0
        %302 = vmatprep.subr.mxu0 0.0
        %303 = vmatpush1.msra.mxu0 0.0
        %304 = vmatprep.subr.mxu0 0.0
        %305 = vmatpush1.msra.mxu0 0.0
        %306 = vmatprep.subr.mxu0 0.0
        %307 = vmatpush1.msra.mxu0 0.0
        %308 = vmatprep.subr.mxu0 0.0
        %309 = vmatpush1.msra.mxu0 0.0
        %310 = vmatprep.subr.mxu0 0.0
        %311 = vmatpush1.msra.mxu0 0.0
        %312 = vmatprep.subr.mxu0 0.0
        %313 = vmatpush1.msra.mxu0 0.0
        %314 = vmatprep.subr.mxu0 0.0
        %315 = vmatpush1.msra.mxu0 0.0
        %316 = vmatprep.subr.mxu0 0.0
        %317 = vmatpush1.msra.mxu0 0.0
        %318 = vmatprep.subr.mxu0 0.0
        %319 = vmatpush1.msra.mxu0 0.0
        %320 = vmatprep.subr.mxu0 0.0
        %321 = vmatpush1.msra.mxu0 0.0
        %322 = vmatprep.subr.mxu0 0.0
        %323 = vmatpush1.msra.mxu0 0.0
        %324 = vmatprep.subr.mxu0 0.0
        %325 = vmatpush1.msra.mxu0 0.0
        %326 = vmatprep.subr.mxu0 0.0
        %327 = vmatpush1.msra.mxu0 0.0
        %328 = vmatprep.subr.mxu0 0.0
        %329 = vmatpush1.msra.mxu0 0.0
        %330 = vmatprep.subr.mxu0 0.0
        %331 = vmatpush1.msra.mxu0 0.0
        %332 = vmatprep.subr.mxu0 0.0
        %333 = vmatpush1.msra.mxu0 0.0
        %334 = vmatprep.subr.mxu0 0.0
        %335 = vmatpush1.msra.mxu0 0.0
        %336 = vmatprep.subr.mxu0 0.0
        %337 = vmatpush1.msra.mxu0 0.0
        %338 = vmatprep.subr.mxu0 0.0
        %339 = vmatpush1.msra.mxu0 0.0
        %340 = vmatprep.subr.mxu0 0.0
        %341 = vmatpush1.msra.mxu0 0.0
        %342 = vmatprep.subr.mxu0 0.0
        %343 = vmatpush1.msra.mxu0 0.0
        %344 = vmatprep.subr.mxu0 0.0
        %345 = vmatpush1.msra.mxu0 0.0
        %346 = vmatprep.subr.mxu0 0.0
        %347 = vmatpush1.msra.mxu0 0.0
        %348 = vmatprep.subr.mxu0 0.0
        %349 = vmatpush1.msra.mxu0 0.0
        %350 = vmatprep.subr.mxu0 0.0
        %351 = vmatpush1.msra.mxu0 0.0
        %352 = vmatprep.subr.mxu0 0.0
        %353 = vmatpush1.msra.mxu0 0.0
        %354 = vmatprep.subr.mxu0 0.0
        %355 = vmatpush1.msra.mxu0 0.0
        %356 = vmatprep.subr.mxu0 0.0
        %357 = vmatpush1.msra.mxu0 0.0
        %358 = vmatprep.mubr.f32.mxu0 0.0
        %359 = vmatmul.mubr.f32.gmra.mrb[0].mxu0 %v271
        %v360 = vpop.f32.mrb[0].mxu0
        %v361 = vadd.f32 0.0, %v360
        %v362 = vpop.f32.mrb[0].mxu0
        %v363 = vadd.f32 0.0, %v362
        %364 = vmatprep.mubr.f32.mxu0 0.0
        %365 = vmatmul.mubr.f32.gmra.mrb[0].mxu0 %v274
        %v366 = vpop.f32.mrb[0].mxu0
        %v367 = vadd.f32 0.0, %v366
        %v368 = vpop.f32.mrb[0].mxu0
        %v369 = vadd.f32 0.0, %v368
        %370 = vmatprep.mubr.f32.mxu0 0.0
        %371 = vmatmul.mubr.f32.gmra.mrb[0].mxu0 %v277
        %v372 = vpop.f32.mrb[0].mxu0
        %v373 = vadd.f32 0.0, %v372
        %v374 = vpop.f32.mrb[0].mxu0
        %v375 = vadd.f32 0.0, %v374
        %376 = vmatprep.mubr.f32.mxu0 0.0
        %377 = vmatmul.mubr.f32.gmra.mrb[0].mxu0 %v280
        %v378 = vpop.f32.mrb[0].mxu0
        %v379 = vadd.f32 0.0, %v378
        %v380 = vpop.f32.mrb[0].mxu0
        %v381 = vadd.f32 0.0, %v380
        %382 = vmatprep.mubr.f32.mxu0 0.0
        %383 = vmatmul.mubr.f32.gmra.mrb[0].mxu0 %v283
        %v384 = vpop.f32.mrb[0].mxu0
        %v385 = vadd.f32 0.0, %v384
        %v386 = vpop.f32.mrb[0].mxu0
        %v387 = vadd.f32 0.0, %v386
        %388 = vmatprep.mubr.f32.mxu0 0.0
        %389 = vmatmul.mubr.f32.gmra.mrb[0].mxu0 %v286
        %v390 = vpop.f32.mrb[0].mxu0
        %v391 = vadd.f32 0.0, %v390
        %v392 = vpop.f32.mrb[0].mxu0
        %v393 = vadd.f32 0.0, %v392
        %394 = vmatprep.mubr.f32.mxu0 0.0
        %395 = vmatmul.mubr.f32.gmra.mrb[0].mxu0 %v289
        %v396 = vpop.f32.mrb[0].mxu0
        %v397 = vadd.f32 0.0, %v396
        %v398 = vpop.f32.mrb[0].mxu0
        %v399 = vadd.f32 0.0, %v398
        %400 = vmatprep.mubr.f32.mxu0 0.0
        %401 = vmatmul.mubr.f32.gmra.mrb[0].mxu0 %v292
        %v402 = vpop.f32.mrb[0].mxu0
        %v403 = vadd.f32 0.0, %v402
        %v404 = vpop.f32.mrb[0].mxu0
        %v405 = vadd.f32 0.0, %v404
        %406 = vdwg.mxu0
        %407 = vmatprep.subr.mxu0 %v256
        %408 = vmatpush1.msra.mxu0 %v255
        %409 = vmatprep.subr.mxu0 0.0
        %410 = vmatpush1.msra.mxu0 0.0
        %411 = vmatprep.subr.mxu0 0.0
        %412 = vmatpush1.msra.mxu0 0.0
        %413 = vmatprep.subr.mxu0 0.0
        %414 = vmatpush1.msra.mxu0 0.0
        %415 = vmatprep.subr.mxu0 0.0
        %416 = vmatpush1.msra.mxu0 0.0
        %417 = vmatprep.subr.mxu0 0.0
        %418 = vmatpush1.msra.mxu0 0.0
        %419 = vmatprep.subr.mxu0 0.0
        %420 = vmatpush1.msra.mxu0 0.0
        %421 = vmatprep.subr.mxu0 0.0
        %422 = vmatpush1.msra.mxu0 0.0
        %423 = vmatprep.subr.mxu0 0.0
        %424 = vmatpush1.msra.mxu0 0.0
        %425 = vmatprep.subr.mxu0 0.0
        %426 = vmatpush1.msra.mxu0 0.0
        %427 = vmatprep.subr.mxu0 0.0
        %428 = vmatpush1.msra.mxu0 0.0
        %429 = vmatprep.subr.mxu0 0.0
        %430 = vmatpush1.msra.mxu0 0.0
        %431 = vmatprep.subr.mxu0 0.0
        %432 = vmatpush1.msra.mxu0 0.0
        %433 = vmatprep.subr.mxu0 0.0
        %434 = vmatpush1.msra.mxu0 0.0
        %435 = vmatprep.subr.mxu0 0.0
        %436 = vmatpush1.msra.mxu0 0.0
        %437 = vmatprep.subr.mxu0 0.0
        %438 = vmatpush1.msra.mxu0 0.0
        %439 = vmatprep.subr.mxu0 0.0
        %440 = vmatpush1.msra.mxu0 0.0
        %441 = vmatprep.subr.mxu0 0.0
        %442 = vmatpush1.msra.mxu0 0.0
        %443 = vmatprep.subr.mxu0 0.0
        %444 = vmatpush1.msra.mxu0 0.0
        %445 = vmatprep.subr.mxu0 0.0
        %446 = vmatpush1.msra.mxu0 0.0
        %447 = vmatprep.subr.mxu0 0.0
        %448 = vmatpush1.msra.mxu0 0.0
        %449 = vmatprep.subr.mxu0 0.0
        %450 = vmatpush1.msra.mxu0 0.0
        %451 = vmatprep.subr.mxu0 0.0
        %452 = vmatpush1.msra.mxu0 0.0
        %453 = vmatprep.subr.mxu0 0.0
        %454 = vmatpush1.msra.mxu0 0.0
        %455 = vmatprep.subr.mxu0 0.0
        %456 = vmatpush1.msra.mxu0 0.0
        %457 = vmatprep.subr.mxu0 0.0
        %458 = vmatpush1.msra.mxu0 0.0
        %459 = vmatprep.subr.mxu0 0.0
        %460 = vmatpush1.msra.mxu0 0.0
        %461 = vmatprep.subr.mxu0 0.0
        %462 = vmatpush1.msra.mxu0 0.0
        %463 = vmatprep.subr.mxu0 0.0
        %464 = vmatpush1.msra.mxu0 0.0
        %465 = vmatprep.subr.mxu0 0.0
        %466 = vmatpush1.msra.mxu0 0.0
        %467 = vmatprep.subr.mxu0 0.0
        %468 = vmatpush1.msra.mxu0 0.0
        %469 = vmatprep.subr.mxu0 0.0
        %470 = vmatpush1.msra.mxu0 0.0
        %471 = vmatprep.mubr.f32.mxu0 0.0
        %472 = vmatmul.mubr.f32.gmra.mrb[0].mxu0 %v271
        %v473 = vpop.f32.mrb[0].mxu0
        %v474 = vadd.f32 0.0, %v473
        %v475 = vpop.f32.mrb[0].mxu0
        %v476 = vadd.f32 0.0, %v475
        %477 = vmatprep.mubr.f32.mxu0 0.0
        %478 = vmatmul.mubr.f32.gmra.mrb[0].mxu0 %v274
        %v479 = vpop.f32.mrb[0].mxu0
        %v480 = vadd.f32 0.0, %v479
        %v481 = vpop.f32.mrb[0].mxu0
        %v482 = vadd.f32 0.0, %v481
        %483 = vmatprep.mubr.f32.mxu0 0.0
        %484 = vmatmul.mubr.f32.gmra.mrb[0].mxu0 %v277
        %v485 = vpop.f32.mrb[0].mxu0
        %v486 = vadd.f32 0.0, %v485
        %v487 = vpop.f32.mrb[0].mxu0
        %v488 = vadd.f32 0.0, %v487
        %489 = vmatprep.mubr.f32.mxu0 0.0
        %490 = vmatmul.mubr.f32.gmra.mrb[0].mxu0 %v280
        %v491 = vpop.f32.mrb[0].mxu0
        %v492 = vadd.f32 0.0, %v491
        %v493 = vpop.f32.mrb[0].mxu0
        %v494 = vadd.f32 0.0, %v493
        %495 = vmatprep.mubr.f32.mxu0 0.0
        %496 = vmatmul.mubr.f32.gmra.mrb[0].mxu0 %v283
        %v497 = vpop.f32.mrb[0].mxu0
        %v498 = vadd.f32 0.0, %v497
        %v499 = vpop.f32.mrb[0].mxu0
        %v500 = vadd.f32 0.0, %v499
        %501 = vmatprep.mubr.f32.mxu0 0.0
        %502 = vmatmul.mubr.f32.gmra.mrb[0].mxu0 %v286
        %v503 = vpop.f32.mrb[0].mxu0
        %v504 = vadd.f32 0.0, %v503
        %v505 = vpop.f32.mrb[0].mxu0
        %v506 = vadd.f32 0.0, %v505
        %507 = vmatprep.mubr.f32.mxu0 0.0
        %508 = vmatmul.mubr.f32.gmra.mrb[0].mxu0 %v289
        %v509 = vpop.f32.mrb[0].mxu0
        %v510 = vadd.f32 0.0, %v509
        %v511 = vpop.f32.mrb[0].mxu0
        %v512 = vadd.f32 0.0, %v511
        %513 = vmatprep.mubr.f32.mxu0 0.0
        %514 = vmatmul.mubr.f32.gmra.mrb[0].mxu0 %v292
        %v515 = vpop.f32.mrb[0].mxu0
        %v516 = vadd.f32 0.0, %v515
        %v517 = vpop.f32.mrb[0].mxu0
        %v518 = vadd.f32 0.0, %v517
        %519 = vdwg.mxu0
        %520 = vmatprep.subr.mxu0 %v258
        %521 = vmatpush1.msra.mxu0 %v257
        %522 = vmatprep.subr.mxu0 0.0
        %523 = vmatpush1.msra.mxu0 0.0
        %524 = vmatprep.subr.mxu0 0.0
        %525 = vmatpush1.msra.mxu0 0.0
        %526 = vmatprep.subr.mxu0 0.0
        %527 = vmatpush1.msra.mxu0 0.0
        %528 = vmatprep.subr.mxu0 0.0
        %529 = vmatpush1.msra.mxu0 0.0
        %530 = vmatprep.subr.mxu0 0.0
        %531 = vmatpush1.msra.mxu0 0.0
        %532 = vmatprep.subr.mxu0 0.0
        %533 = vmatpush1.msra.mxu0 0.0
        %534 = vmatprep.subr.mxu0 0.0
        %535 = vmatpush1.msra.mxu0 0.0
        %536 = vmatprep.subr.mxu0 0.0
        %537 = vmatpush1.msra.mxu0 0.0
        %538 = vmatprep.subr.mxu0 0.0
        %539 = vmatpush1.msra.mxu0 0.0
        %540 = vmatprep.subr.mxu0 0.0
        %541 = vmatpush1.msra.mxu0 0.0
        %542 = vmatprep.subr.mxu0 0.0
        %543 = vmatpush1.msra.mxu0 0.0
        %544 = vmatprep.subr.mxu0 0.0
        %545 = vmatpush1.msra.mxu0 0.0
        %546 = vmatprep.subr.mxu0 0.0
        %547 = vmatpush1.msra.mxu0 0.0
        %548 = vmatprep.subr.mxu0 0.0
        %549 = vmatpush1.msra.mxu0 0.0
        %550 = vmatprep.subr.mxu0 0.0
        %551 = vmatpush1.msra.mxu0 0.0
        %552 = vmatprep.subr.mxu0 0.0
        %553 = vmatpush1.msra.mxu0 0.0
        %554 = vmatprep.subr.mxu0 0.0
        %555 = vmatpush1.msra.mxu0 0.0
        %556 = vmatprep.subr.mxu0 0.0
        %557 = vmatpush1.msra.mxu0 0.0
        %558 = vmatprep.subr.mxu0 0.0
        %559 = vmatpush1.msra.mxu0 0.0
        %560 = vmatprep.subr.mxu0 0.0
        %561 = vmatpush1.msra.mxu0 0.0
        %562 = vmatprep.subr.mxu0 0.0
        %563 = vmatpush1.msra.mxu0 0.0
        %564 = vmatprep.subr.mxu0 0.0
        %565 = vmatpush1.msra.mxu0 0.0
        %566 = vmatprep.subr.mxu0 0.0
        %567 = vmatpush1.msra.mxu0 0.0
        %568 = vmatprep.subr.mxu0 0.0
        %569 = vmatpush1.msra.mxu0 0.0
        %570 = vmatprep.subr.mxu0 0.0
        %571 = vmatpush1.msra.mxu0 0.0
        %572 = vmatprep.subr.mxu0 0.0
        %573 = vmatpush1.msra.mxu0 0.0
        %574 = vmatprep.subr.mxu0 0.0
        %575 = vmatpush1.msra.mxu0 0.0
        %576 = vmatprep.subr.mxu0 0.0
        %577 = vmatpush1.msra.mxu0 0.0
        %578 = vmatprep.subr.mxu0 0.0
        %579 = vmatpush1.msra.mxu0 0.0
        %580 = vmatprep.subr.mxu0 0.0
        %581 = vmatpush1.msra.mxu0 0.0
        %582 = vmatprep.subr.mxu0 0.0
        %583 = vmatpush1.msra.mxu0 0.0
        %584 = vmatprep.mubr.f32.mxu0 0.0
        %585 = vmatmul.mubr.f32.gmra.mrb[0].mxu0 %v271
        %v586 = vpop.f32.mrb[0].mxu0
        %v587 = vadd.f32 0.0, %v586
        %v588 = vpop.f32.mrb[0].mxu0
        %v589 = vadd.f32 0.0, %v588
        %590 = vmatprep.mubr.f32.mxu0 0.0
        %591 = vmatmul.mubr.f32.gmra.mrb[0].mxu0 %v274
        %v592 = vpop.f32.mrb[0].mxu0
        %v593 = vadd.f32 0.0, %v592
        %v594 = vpop.f32.mrb[0].mxu0
        %v595 = vadd.f32 0.0, %v594
        %596 = vmatprep.mubr.f32.mxu0 0.0
        %597 = vmatmul.mubr.f32.gmra.mrb[0].mxu0 %v277
        %v598 = vpop.f32.mrb[0].mxu0
        %v599 = vadd.f32 0.0, %v598
        %v600 = vpop.f32.mrb[0].mxu0
        %v601 = vadd.f32 0.0, %v600
        %602 = vmatprep.mubr.f32.mxu0 0.0
        %603 = vmatmul.mubr.f32.gmra.mrb[0].mxu0 %v280
        %v604 = vpop.f32.mrb[0].mxu0
        %v605 = vadd.f32 0.0, %v604
        %v606 = vpop.f32.mrb[0].mxu0
        %v607 = vadd.f32 0.0, %v606
        %608 = vmatprep.mubr.f32.mxu0 0.0
        %609 = vmatmul.mubr.f32.gmra.mrb[0].mxu0 %v283
        %v610 = vpop.f32.mrb[0].mxu0
        %v611 = vadd.f32 0.0, %v610
        %v612 = vpop.f32.mrb[0].mxu0
        %v613 = vadd.f32 0.0, %v612
        %614 = vmatprep.mubr.f32.mxu0 0.0
        %615 = vmatmul.mubr.f32.gmra.mrb[0].mxu0 %v286
        %v616 = vpop.f32.mrb[0].mxu0
        %v617 = vadd.f32 0.0, %v616
        %v618 = vpop.f32.mrb[0].mxu0
        %v619 = vadd.f32 0.0, %v618
        %620 = vmatprep.mubr.f32.mxu0 0.0
        %621 = vmatmul.mubr.f32.gmra.mrb[0].mxu0 %v289
        %v622 = vpop.f32.mrb[0].mxu0
        %v623 = vadd.f32 0.0, %v622
        %v624 = vpop.f32.mrb[0].mxu0
        %v625 = vadd.f32 0.0, %v624
        %626 = vmatprep.mubr.f32.mxu0 0.0
        %627 = vmatmul.mubr.f32.gmra.mrb[0].mxu0 %v292
        %v628 = vpop.f32.mrb[0].mxu0
        %v629 = vadd.f32 0.0, %v628
        %v630 = vpop.f32.mrb[0].mxu0
        %v631 = vadd.f32 0.0, %v630
        %632 = vdwg.mxu0
        %633 = vmatprep.subr.mxu0 %v260
        %634 = vmatpush1.msra.mxu0 %v259
        %635 = vmatprep.subr.mxu0 0.0
        %636 = vmatpush1.msra.mxu0 0.0
        %637 = vmatprep.subr.mxu0 0.0
        %638 = vmatpush1.msra.mxu0 0.0
        %639 = vmatprep.subr.mxu0 0.0
        %640 = vmatpush1.msra.mxu0 0.0
        %641 = vmatprep.subr.mxu0 0.0
        %642 = vmatpush1.msra.mxu0 0.0
        %643 = vmatprep.subr.mxu0 0.0
        %644 = vmatpush1.msra.mxu0 0.0
        %645 = vmatprep.subr.mxu0 0.0
        %646 = vmatpush1.msra.mxu0 0.0
        %647 = vmatprep.subr.mxu0 0.0
        %648 = vmatpush1.msra.mxu0 0.0
        %649 = vmatprep.subr.mxu0 0.0
        %650 = vmatpush1.msra.mxu0 0.0
        %651 = vmatprep.subr.mxu0 0.0
        %652 = vmatpush1.msra.mxu0 0.0
        %653 = vmatprep.subr.mxu0 0.0
        %654 = vmatpush1.msra.mxu0 0.0
        %655 = vmatprep.subr.mxu0 0.0
        %656 = vmatpush1.msra.mxu0 0.0
        %657 = vmatprep.subr.mxu0 0.0
        %658 = vmatpush1.msra.mxu0 0.0
        %659 = vmatprep.subr.mxu0 0.0
        %660 = vmatpush1.msra.mxu0 0.0
        %661 = vmatprep.subr.mxu0 0.0
        %662 = vmatpush1.msra.mxu0 0.0
        %663 = vmatprep.subr.mxu0 0.0
        %664 = vmatpush1.msra.mxu0 0.0
        %665 = vmatprep.subr.mxu0 0.0
        %666 = vmatpush1.msra.mxu0 0.0
        %667 = vmatprep.subr.mxu0 0.0
        %668 = vmatpush1.msra.mxu0 0.0
        %669 = vmatprep.subr.mxu0 0.0
        %670 = vmatpush1.msra.mxu0 0.0
        %671 = vmatprep.subr.mxu0 0.0
        %672 = vmatpush1.msra.mxu0 0.0
        %673 = vmatprep.subr.mxu0 0.0
        %674 = vmatpush1.msra.mxu0 0.0
        %675 = vmatprep.subr.mxu0 0.0
        %676 = vmatpush1.msra.mxu0 0.0
        %677 = vmatprep.subr.mxu0 0.0
        %678 = vmatpush1.msra.mxu0 0.0
        %679 = vmatprep.subr.mxu0 0.0
        %680 = vmatpush1.msra.mxu0 0.0
        %681 = vmatprep.subr.mxu0 0.0
        %682 = vmatpush1.msra.mxu0 0.0
        %683 = vmatprep.subr.mxu0 0.0
        %684 = vmatpush1.msra.mxu0 0.0
        %685 = vmatprep.subr.mxu0 0.0
        %686 = vmatpush1.msra.mxu0 0.0
        %687 = vmatprep.subr.mxu0 0.0
        %688 = vmatpush1.msra.mxu0 0.0
        %689 = vmatprep.subr.mxu0 0.0
        %690 = vmatpush1.msra.mxu0 0.0
        %691 = vmatprep.subr.mxu0 0.0
        %692 = vmatpush1.msra.mxu0 0.0
        %693 = vmatprep.subr.mxu0 0.0
        %694 = vmatpush1.msra.mxu0 0.0
        %695 = vmatprep.subr.mxu0 0.0
        %696 = vmatpush1.msra.mxu0 0.0
        %697 = vmatprep.mubr.f32.mxu0 0.0
        %698 = vmatmul.mubr.f32.gmra.mrb[0].mxu0 %v271
        %v699 = vpop.f32.mrb[0].mxu0
        %v700 = vadd.f32 0.0, %v699
        %v701 = vpop.f32.mrb[0].mxu0
        %v702 = vadd.f32 0.0, %v701
        %703 = vmatprep.mubr.f32.mxu0 0.0
        %704 = vmatmul.mubr.f32.gmra.mrb[0].mxu0 %v274
        %v705 = vpop.f32.mrb[0].mxu0
        %v706 = vadd.f32 0.0, %v705
        %v707 = vpop.f32.mrb[0].mxu0
        %v708 = vadd.f32 0.0, %v707
        %709 = vmatprep.mubr.f32.mxu0 0.0
        %710 = vmatmul.mubr.f32.gmra.mrb[0].mxu0 %v277
        %v711 = vpop.f32.mrb[0].mxu0
        %v712 = vadd.f32 0.0, %v711
        %v713 = vpop.f32.mrb[0].mxu0
        %v714 = vadd.f32 0.0, %v713
        %715 = vmatprep.mubr.f32.mxu0 0.0
        %716 = vmatmul.mubr.f32.gmra.mrb[0].mxu0 %v280
        %v717 = vpop.f32.mrb[0].mxu0
        %v718 = vadd.f32 0.0, %v717
        %v719 = vpop.f32.mrb[0].mxu0
        %v720 = vadd.f32 0.0, %v719
        %721 = vmatprep.mubr.f32.mxu0 0.0
        %722 = vmatmul.mubr.f32.gmra.mrb[0].mxu0 %v283
        %v723 = vpop.f32.mrb[0].mxu0
        %v724 = vadd.f32 0.0, %v723
        %v725 = vpop.f32.mrb[0].mxu0
        %v726 = vadd.f32 0.0, %v725
        %727 = vmatprep.mubr.f32.mxu0 0.0
        %728 = vmatmul.mubr.f32.gmra.mrb[0].mxu0 %v286
        %v729 = vpop.f32.mrb[0].mxu0
        %v730 = vadd.f32 0.0, %v729
        %v731 = vpop.f32.mrb[0].mxu0
        %v732 = vadd.f32 0.0, %v731
        %733 = vmatprep.mubr.f32.mxu0 0.0
        %734 = vmatmul.mubr.f32.gmra.mrb[0].mxu0 %v289
        %v735 = vpop.f32.mrb[0].mxu0
        %v736 = vadd.f32 0.0, %v735
        %v737 = vpop.f32.mrb[0].mxu0
        %v738 = vadd.f32 0.0, %v737
        %739 = vmatprep.mubr.f32.mxu0 0.0
        %740 = vmatmul.mubr.f32.gmra.mrb[0].mxu0 %v292
        %v741 = vpop.f32.mrb[0].mxu0
        %v742 = vadd.f32 0.0, %v741
        %v743 = vpop.f32.mrb[0].mxu0
        %v744 = vadd.f32 0.0, %v743
        %745 = vdwg.mxu0
        %v746 = vtanh.pop %v361
        %v747 = vtanh.pop %v363
        %v748 = vtanh.pop %v474
        %v749 = vtanh.pop %v476
        %v750 = vtanh.pop %v587
        %v751 = vtanh.pop %v589
        %v752 = vtanh.pop %v700
        %v753 = vtanh.pop %v702
        %v754 = vtanh.pop %v367
        %v755 = vtanh.pop %v369
        %v756 = vtanh.pop %v480
        %v757 = vtanh.pop %v482
        %v758 = vtanh.pop %v593
        %v759 = vtanh.pop %v595
        %v760 = vtanh.pop %v706
        %v761 = vtanh.pop %v708
        %v762 = vtanh.pop %v373
        %v763 = vtanh.pop %v375
        %v764 = vtanh.pop %v486
        %v765 = vtanh.pop %v488
        %v766 = vtanh.pop %v599
        %v767 = vtanh.pop %v601
        %v768 = vtanh.pop %v712
        %v769 = vtanh.pop %v714
        %v770 = vmul.f32 %v379, %v379
        %v771 = vmul.f32 %v381, %v381
        %v772 = vmul.f32 %v492, %v492
        %v773 = vmul.f32 %v494, %v494
        %v774 = vmul.f32 %v605, %v605
        %v775 = vmul.f32 %v607, %v607
        %v776 = vmul.f32 %v718, %v718
        %v777 = vmul.f32 %v720, %v720
        %v786 = vrot.slane %v770, 4
        %v787 = vrot.slane %v771, 4
        %v788 = vrot.slane %v772, 4
        %v789 = vrot.slane %v773, 4
        %v790 = vrot.slane %v774, 4
        %v791 = vrot.slane %v775, 4
        %v792 = vrot.slane %v776, 4
        %v793 = vrot.slane %v777, 4
        %v802 = vadd.f32 %v770, %v786
        %v803 = vadd.f32 %v771, %v787
        %v804 = vadd.f32 %v772, %v788
        %v805 = vadd.f32 %v773, %v789
        %v806 = vadd.f32 %v774, %v790
        %v807 = vadd.f32 %v775, %v791
        %v808 = vadd.f32 %v776, %v792
        %v809 = vadd.f32 %v777, %v793
        %v810 = vmul.f32 %v385, %v385
        %v811 = vmul.f32 %v387, %v387
        %v812 = vmul.f32 %v498, %v498
        %v813 = vmul.f32 %v500, %v500
        %v814 = vmul.f32 %v611, %v611
        %v815 = vmul.f32 %v613, %v613
        %v816 = vmul.f32 %v724, %v724
        %v817 = vmul.f32 %v726, %v726
        %v818 = vadd.f32 %v802, %v810
        %v819 = vadd.f32 %v803, %v811
        %v820 = vadd.f32 %v804, %v812
        %v821 = vadd.f32 %v805, %v813
        %v822 = vadd.f32 %v806, %v814
        %v823 = vadd.f32 %v807, %v815
        %v824 = vadd.f32 %v808, %v816
        %v825 = vadd.f32 %v809, %v817
        %v826 = vrsqrt.pop %v818
        %v827 = vmul.f32 %v818, %v826
        %vm828 = vcmp.eq.f32.partialorder %v818, inf
        %v829 = vsel %vm828, %v818, %v827
        %vm830 = vcmp.eq.f32.partialorder %v818, 0.0
        %v831 = vand.u32 %v818, 2147483648
        %v832 = vsel %vm830, %v831, %v829
        %v833 = vrsqrt.pop %v819
        %v834 = vmul.f32 %v819, %v833
        %vm835 = vcmp.eq.f32.partialorder %v819, inf
        %v836 = vsel %vm835, %v819, %v834
        %vm837 = vcmp.eq.f32.partialorder %v819, 0.0
        %v838 = vand.u32 %v819, 2147483648
        %v839 = vsel %vm837, %v838, %v836
        %v840 = vrsqrt.pop %v820
        %v841 = vmul.f32 %v820, %v840
        %vm842 = vcmp.eq.f32.partialorder %v820, inf
        %v843 = vsel %vm842, %v820, %v841
        %vm844 = vcmp.eq.f32.partialorder %v820, 0.0
        %v845 = vand.u32 %v820, 2147483648
        %v846 = vsel %vm844, %v845, %v843
        %v847 = vrsqrt.pop %v821
        %v848 = vmul.f32 %v821, %v847
        %vm849 = vcmp.eq.f32.partialorder %v821, inf
        %v850 = vsel %vm849, %v821, %v848
        %vm851 = vcmp.eq.f32.partialorder %v821, 0.0
        %v852 = vand.u32 %v821, 2147483648
        %v853 = vsel %vm851, %v852, %v850
        %v854 = vrsqrt.pop %v822
        %v855 = vmul.f32 %v822, %v854
        %vm856 = vcmp.eq.f32.partialorder %v822, inf
        %v857 = vsel %vm856, %v822, %v855
        %vm858 = vcmp.eq.f32.partialorder %v822, 0.0
        %v859 = vand.u32 %v822, 2147483648
        %v860 = vsel %vm858, %v859, %v857
        %v861 = vrsqrt.pop %v823
        %v862 = vmul.f32 %v823, %v861
        %vm863 = vcmp.eq.f32.partialorder %v823, inf
        %v864 = vsel %vm863, %v823, %v862
        %vm865 = vcmp.eq.f32.partialorder %v823, 0.0
        %v866 = vand.u32 %v823, 2147483648
        %v867 = vsel %vm865, %v866, %v864
        %v868 = vrsqrt.pop %v824
        %v869 = vmul.f32 %v824, %v868
        %vm870 = vcmp.eq.f32.partialorder %v824, inf
        %v871 = vsel %vm870, %v824, %v869
        %vm872 = vcmp.eq.f32.partialorder %v824, 0.0
        %v873 = vand.u32 %v824, 2147483648
        %v874 = vsel %vm872, %v873, %v871
        %v875 = vrsqrt.pop %v825
        %v876 = vmul.f32 %v825, %v875
        %vm877 = vcmp.eq.f32.partialorder %v825, inf
        %v878 = vsel %vm877, %v825, %v876
        %vm879 = vcmp.eq.f32.partialorder %v825, 0.0
        %v880 = vand.u32 %v825, 2147483648
        %v881 = vsel %vm879, %v880, %v878
        %v890 = vrot.slane %v832, 4
        %v891 = vrot.slane %v839, 4
        %v892 = vrot.slane %v846, 4
        %v893 = vrot.slane %v853, 4
        %v894 = vrot.slane %v860, 4
        %v895 = vrot.slane %v867, 4
        %v896 = vrot.slane %v874, 4
        %v897 = vrot.slane %v881, 4
        %v906 = vsel %vm252, %v385, %v890
        %v907 = vsel %vm252, %v387, %v891
        %v908 = vsel %vm252, %v498, %v892
        %v909 = vsel %vm252, %v500, %v893
        %v910 = vsel %vm252, %v611, %v894
        %v911 = vsel %vm252, %v613, %v895
        %v912 = vsel %vm252, %v724, %v896
        %v913 = vsel %vm252, %v726, %v897
        %v914 = vld [vmem:[%s2] sm:$0xf]
        %v915 = vld [vmem:[%s2 + $0x4] sm:$0xf]
        %v916 = vld [vmem:[%s2 + $0x8] sm:$0xf]
        %v917 = vld [vmem:[%s2 + $0xc] sm:$0xf]
        %v918 = vpack.c.bf16 %v754, %v746
        %v919 = vpack.c.bf16 %v755, %v747
        %v920 = vpack.c.bf16 %v756, %v748
        %v921 = vpack.c.bf16 %v757, %v749
        %v922 = vpack.c.bf16 %v758, %v750
        %v923 = vpack.c.bf16 %v759, %v751
        %v924 = vpack.c.bf16 %v760, %v752
        %v925 = vpack.c.bf16 %v761, %v753
        %v926 = vpack.c.bf16 %v379, %v762
        %v927 = vpack.c.bf16 %v381, %v763
        %v928 = vpack.c.bf16 %v492, %v764
        %v929 = vpack.c.bf16 %v494, %v765
        %v930 = vpack.c.bf16 %v605, %v766
        %v931 = vpack.c.bf16 %v607, %v767
        %v932 = vpack.c.bf16 %v718, %v768
        %v933 = vpack.c.bf16 %v720, %v769
        %v934 = vpack.c.bf16 %v253, %v906
        %v935 = vpack.c.bf16 %v254, %v907
        %v936 = vpack.c.bf16 %v255, %v908
        %v937 = vpack.c.bf16 %v256, %v909
        %v938 = vpack.c.bf16 %v257, %v910
        %v939 = vpack.c.bf16 %v258, %v911
        %v940 = vpack.c.bf16 %v259, %v912
        %v941 = vpack.c.bf16 %v260, %v913
        %v946 = vunpack.c.l.b16 %v914
        %v947 = vunpack.c.l.b16 %v915
        %v948 = vunpack.c.l.b16 %v916
        %v949 = vunpack.c.l.b16 %v917
        %v950 = vpack.c.b16 %v947, %v946
        %v951 = vpack.c.b16 %v949, %v948
        %vm952 = vcmask 392192
        %v954 = vsel %vm952, %v950, 0
        %v957 = vsel %vm952, %v951, 0
        %959 = vmatprep.subr.bf16.mxu0 %v919
        %960 = vmatpush1.bf16.msra.mxu0 %v918
        %961 = vmatprep.subr.bf16.mxu0 %v927
        %962 = vmatpush1.bf16.msra.mxu0 %v926
        %963 = vmatprep.subr.bf16.mxu0 %v935
        %964 = vmatpush1.bf16.msra.mxu0 %v934
        %965 = vmatprep.subr.bf16.mxu0 0
        %966 = vmatpush1.bf16.msra.mxu0 0
        %967 = vmatprep.subr.bf16.mxu0 0
        %968 = vmatpush1.bf16.msra.mxu0 0
        %969 = vmatprep.subr.bf16.mxu0 0
        %970 = vmatpush1.bf16.msra.mxu0 0
        %971 = vmatprep.subr.bf16.mxu0 0
        %972 = vmatpush1.bf16.msra.mxu0 0
        %973 = vmatprep.subr.bf16.mxu0 0
        %974 = vmatpush1.bf16.msra.mxu0 0
        %975 = vmatprep.subr.bf16.mxu0 0
        %976 = vmatpush1.bf16.msra.mxu0 0
        %977 = vmatprep.subr.bf16.mxu0 0
        %978 = vmatpush1.bf16.msra.mxu0 0
        %979 = vmatprep.subr.bf16.mxu0 0
        %980 = vmatpush1.bf16.msra.mxu0 0
        %981 = vmatprep.subr.bf16.mxu0 0
        %982 = vmatpush1.bf16.msra.mxu0 0
        %983 = vmatprep.subr.bf16.mxu0 0
        %984 = vmatpush1.bf16.msra.mxu0 0
        %985 = vmatprep.subr.bf16.mxu0 0
        %986 = vmatpush1.bf16.msra.mxu0 0
        %987 = vmatprep.subr.bf16.mxu0 0
        %988 = vmatpush1.bf16.msra.mxu0 0
        %989 = vmatprep.subr.bf16.mxu0 0
        %990 = vmatpush1.bf16.msra.mxu0 0
        %991 = vmatprep.mubr.bf16.mxu0 0
        %992 = vmatmul.mubr.bf16.gmra.mrb[0].mxu0 %v954
        %v993 = vpop.f32.mrb[0].mxu0
        %v994 = vadd.f32 0.0, %v993
        %v995 = vpop.f32.mrb[0].mxu0
        %v996 = vadd.f32 0.0, %v995
        %v997 = vpop.f32.mrb[0].mxu0
        %v998 = vadd.f32 0.0, %v997
        %v999 = vpop.f32.mrb[0].mxu0
        %v1000 = vadd.f32 0.0, %v999
        %1001 = vmatprep.mubr.bf16.mxu0 0
        %1002 = vmatmul.mubr.bf16.gmra.mrb[0].mxu0 %v957
        %v1003 = vpop.f32.mrb[0].mxu0
        %v1004 = vadd.f32 0.0, %v1003
        %v1005 = vpop.f32.mrb[0].mxu0
        %v1006 = vadd.f32 0.0, %v1005
        %v1007 = vpop.f32.mrb[0].mxu0
        %v1008 = vadd.f32 0.0, %v1007
        %v1009 = vpop.f32.mrb[0].mxu0
        %v1010 = vadd.f32 0.0, %v1009
        %1011 = vdwg.mxu0
        %1012 = vmatprep.subr.bf16.mxu0 %v921
        %1013 = vmatpush1.bf16.msra.mxu0 %v920
        %1014 = vmatprep.subr.bf16.mxu0 %v929
        %1015 = vmatpush1.bf16.msra.mxu0 %v928
        %1016 = vmatprep.subr.bf16.mxu0 %v937
        %1017 = vmatpush1.bf16.msra.mxu0 %v936
        %1018 = vmatprep.subr.bf16.mxu0 0
        %1019 = vmatpush1.bf16.msra.mxu0 0
        %1020 = vmatprep.subr.bf16.mxu0 0
        %1021 = vmatpush1.bf16.msra.mxu0 0
        %1022 = vmatprep.subr.bf16.mxu0 0
        %1023 = vmatpush1.bf16.msra.mxu0 0
        %1024 = vmatprep.subr.bf16.mxu0 0
        %1025 = vmatpush1.bf16.msra.mxu0 0
        %1026 = vmatprep.subr.bf16.mxu0 0
        %1027 = vmatpush1.bf16.msra.mxu0 0
        %1028 = vmatprep.subr.bf16.mxu0 0
        %1029 = vmatpush1.bf16.msra.mxu0 0
        %1030 = vmatprep.subr.bf16.mxu0 0
        %1031 = vmatpush1.bf16.msra.mxu0 0
        %1032 = vmatprep.subr.bf16.mxu0 0
        %1033 = vmatpush1.bf16.msra.mxu0 0
        %1034 = vmatprep.subr.bf16.mxu0 0
        %1035 = vmatpush1.bf16.msra.mxu0 0
        %1036 = vmatprep.subr.bf16.mxu0 0
        %1037 = vmatpush1.bf16.msra.mxu0 0
        %1038 = vmatprep.subr.bf16.mxu0 0
        %1039 = vmatpush1.bf16.msra.mxu0 0
        %1040 = vmatprep.subr.bf16.mxu0 0
        %1041 = vmatpush1.bf16.msra.mxu0 0
        %1042 = vmatprep.subr.bf16.mxu0 0
        %1043 = vmatpush1.bf16.msra.mxu0 0
        %1044 = vmatprep.mubr.bf16.mxu0 0
        %1045 = vmatmul.mubr.bf16.gmra.mrb[0].mxu0 %v954
        %v1046 = vpop.f32.mrb[0].mxu0
        %v1047 = vadd.f32 0.0, %v1046
        %v1048 = vpop.f32.mrb[0].mxu0
        %v1049 = vadd.f32 0.0, %v1048
        %v1050 = vpop.f32.mrb[0].mxu0
        %v1051 = vadd.f32 0.0, %v1050
        %v1052 = vpop.f32.mrb[0].mxu0
        %v1053 = vadd.f32 0.0, %v1052
        %1054 = vmatprep.mubr.bf16.mxu0 0
        %1055 = vmatmul.mubr.bf16.gmra.mrb[0].mxu0 %v957
        %v1056 = vpop.f32.mrb[0].mxu0
        %v1057 = vadd.f32 0.0, %v1056
        %v1058 = vpop.f32.mrb[0].mxu0
        %v1059 = vadd.f32 0.0, %v1058
        %v1060 = vpop.f32.mrb[0].mxu0
        %v1061 = vadd.f32 0.0, %v1060
        %v1062 = vpop.f32.mrb[0].mxu0
        %v1063 = vadd.f32 0.0, %v1062
        %1064 = vdwg.mxu0
        %1065 = vmatprep.subr.bf16.mxu0 %v923
        %1066 = vmatpush1.bf16.msra.mxu0 %v922
        %1067 = vmatprep.subr.bf16.mxu0 %v931
        %1068 = vmatpush1.bf16.msra.mxu0 %v930
        %1069 = vmatprep.subr.bf16.mxu0 %v939
        %1070 = vmatpush1.bf16.msra.mxu0 %v938
        %1071 = vmatprep.subr.bf16.mxu0 0
        %1072 = vmatpush1.bf16.msra.mxu0 0
        %1073 = vmatprep.subr.bf16.mxu0 0
        %1074 = vmatpush1.bf16.msra.mxu0 0
        %1075 = vmatprep.subr.bf16.mxu0 0
        %1076 = vmatpush1.bf16.msra.mxu0 0
        %1077 = vmatprep.subr.bf16.mxu0 0
        %1078 = vmatpush1.bf16.msra.mxu0 0
        %1079 = vmatprep.subr.bf16.mxu0 0
        %1080 = vmatpush1.bf16.msra.mxu0 0
        %1081 = vmatprep.subr.bf16.mxu0 0
        %1082 = vmatpush1.bf16.msra.mxu0 0
        %1083 = vmatprep.subr.bf16.mxu0 0
        %1084 = vmatpush1.bf16.msra.mxu0 0
        %1085 = vmatprep.subr.bf16.mxu0 0
        %1086 = vmatpush1.bf16.msra.mxu0 0
        %1087 = vmatprep.subr.bf16.mxu0 0
        %1088 = vmatpush1.bf16.msra.mxu0 0
        %1089 = vmatprep.subr.bf16.mxu0 0
        %1090 = vmatpush1.bf16.msra.mxu0 0
        %1091 = vmatprep.subr.bf16.mxu0 0
        %1092 = vmatpush1.bf16.msra.mxu0 0
        %1093 = vmatprep.subr.bf16.mxu0 0
        %1094 = vmatpush1.bf16.msra.mxu0 0
        %1095 = vmatprep.subr.bf16.mxu0 0
        %1096 = vmatpush1.bf16.msra.mxu0 0
        %1097 = vmatprep.mubr.bf16.mxu0 0
        %1098 = vmatmul.mubr.bf16.gmra.mrb[0].mxu0 %v954
        %v1099 = vpop.f32.mrb[0].mxu0
        %v1100 = vadd.f32 0.0, %v1099
        %v1101 = vpop.f32.mrb[0].mxu0
        %v1102 = vadd.f32 0.0, %v1101
        %v1103 = vpop.f32.mrb[0].mxu0
        %v1104 = vadd.f32 0.0, %v1103
        %v1105 = vpop.f32.mrb[0].mxu0
        %v1106 = vadd.f32 0.0, %v1105
        %1107 = vmatprep.mubr.bf16.mxu0 0
        %1108 = vmatmul.mubr.bf16.gmra.mrb[0].mxu0 %v957
        %v1109 = vpop.f32.mrb[0].mxu0
        %v1110 = vadd.f32 0.0, %v1109
        %v1111 = vpop.f32.mrb[0].mxu0
        %v1112 = vadd.f32 0.0, %v1111
        %v1113 = vpop.f32.mrb[0].mxu0
        %v1114 = vadd.f32 0.0, %v1113
        %v1115 = vpop.f32.mrb[0].mxu0
        %v1116 = vadd.f32 0.0, %v1115
        %1117 = vdwg.mxu0
        %1118 = vmatprep.subr.bf16.mxu0 %v925
        %1119 = vmatpush1.bf16.msra.mxu0 %v924
        %1120 = vmatprep.subr.bf16.mxu0 %v933
        %1121 = vmatpush1.bf16.msra.mxu0 %v932
        %1122 = vmatprep.subr.bf16.mxu0 %v941
        %1123 = vmatpush1.bf16.msra.mxu0 %v940
        %1124 = vmatprep.subr.bf16.mxu0 0
        %1125 = vmatpush1.bf16.msra.mxu0 0
        %1126 = vmatprep.subr.bf16.mxu0 0
        %1127 = vmatpush1.bf16.msra.mxu0 0
        %1128 = vmatprep.subr.bf16.mxu0 0
        %1129 = vmatpush1.bf16.msra.mxu0 0
        %1130 = vmatprep.subr.bf16.mxu0 0
        %1131 = vmatpush1.bf16.msra.mxu0 0
        %1132 = vmatprep.subr.bf16.mxu0 0
        %1133 = vmatpush1.bf16.msra.mxu0 0
        %1134 = vmatprep.subr.bf16.mxu0 0
        %1135 = vmatpush1.bf16.msra.mxu0 0
        %1136 = vmatprep.subr.bf16.mxu0 0
        %1137 = vmatpush1.bf16.msra.mxu0 0
        %1138 = vmatprep.subr.bf16.mxu0 0
        %1139 = vmatpush1.bf16.msra.mxu0 0
        %1140 = vmatprep.subr.bf16.mxu0 0
        %1141 = vmatpush1.bf16.msra.mxu0 0
        %1142 = vmatprep.subr.bf16.mxu0 0
        %1143 = vmatpush1.bf16.msra.mxu0 0
        %1144 = vmatprep.subr.bf16.mxu0 0
        %1145 = vmatpush1.bf16.msra.mxu0 0
        %1146 = vmatprep.subr.bf16.mxu0 0
        %1147 = vmatpush1.bf16.msra.mxu0 0
        %1148 = vmatprep.subr.bf16.mxu0 0
        %1149 = vmatpush1.bf16.msra.mxu0 0
        %1150 = vmatprep.mubr.bf16.mxu0 0
        %1151 = vmatmul.mubr.bf16.gmra.mrb[0].mxu0 %v954
        %v1152 = vpop.f32.mrb[0].mxu0
        %v1153 = vadd.f32 0.0, %v1152
        %v1154 = vpop.f32.mrb[0].mxu0
        %v1155 = vadd.f32 0.0, %v1154
        %v1156 = vpop.f32.mrb[0].mxu0
        %v1157 = vadd.f32 0.0, %v1156
        %v1158 = vpop.f32.mrb[0].mxu0
        %v1159 = vadd.f32 0.0, %v1158
        %1160 = vmatprep.mubr.bf16.mxu0 0
        %1161 = vmatmul.mubr.bf16.gmra.mrb[0].mxu0 %v957
        %v1162 = vpop.f32.mrb[0].mxu0
        %v1163 = vadd.f32 0.0, %v1162
        %v1164 = vpop.f32.mrb[0].mxu0
        %v1165 = vadd.f32 0.0, %v1164
        %v1166 = vpop.f32.mrb[0].mxu0
        %v1167 = vadd.f32 0.0, %v1166
        %v1168 = vpop.f32.mrb[0].mxu0
        %v1169 = vadd.f32 0.0, %v1168
        %1170 = vdwg.mxu0
        %v1171 = vmax.f32 %v994, 0.0
        %v1172 = vmax.f32 %v996, 0.0
        %v1173 = vmax.f32 %v1047, 0.0
        %v1174 = vmax.f32 %v1049, 0.0
        %v1175 = vmax.f32 %v1100, 0.0
        %v1176 = vmax.f32 %v1102, 0.0
        %v1177 = vmax.f32 %v1153, 0.0
        %v1178 = vmax.f32 %v1155, 0.0
        %v1179 = vmax.f32 %v998, 0.0
        %v1180 = vmax.f32 %v1000, 0.0
        %v1181 = vmax.f32 %v1051, 0.0
        %v1182 = vmax.f32 %v1053, 0.0
        %v1183 = vmax.f32 %v1104, 0.0
        %v1184 = vmax.f32 %v1106, 0.0
        %v1185 = vmax.f32 %v1157, 0.0
        %v1186 = vmax.f32 %v1159, 0.0
        %v1187 = vmax.f32 %v1004, 0.0
        %v1188 = vmax.f32 %v1006, 0.0
        %v1189 = vmax.f32 %v1057, 0.0
        %v1190 = vmax.f32 %v1059, 0.0
        %v1191 = vmax.f32 %v1110, 0.0
        %v1192 = vmax.f32 %v1112, 0.0
        %v1193 = vmax.f32 %v1163, 0.0
        %v1194 = vmax.f32 %v1165, 0.0
        %v1195 = vmax.f32 %v1008, 0.0
        %v1196 = vmax.f32 %v1010, 0.0
        %v1197 = vmax.f32 %v1061, 0.0
        %v1198 = vmax.f32 %v1063, 0.0
        %v1199 = vmax.f32 %v1114, 0.0
        %v1200 = vmax.f32 %v1116, 0.0
        %v1201 = vmax.f32 %v1167, 0.0
        %v1202 = vmax.f32 %v1169, 0.0
        %v1203 = vpack.c.bf16 %v1179, %v1171
        %v1204 = vpack.c.bf16 %v1180, %v1172
        %v1205 = vpack.c.bf16 %v1181, %v1173
        %v1206 = vpack.c.bf16 %v1182, %v1174
        %v1207 = vpack.c.bf16 %v1183, %v1175
        %v1208 = vpack.c.bf16 %v1184, %v1176
        %v1209 = vpack.c.bf16 %v1185, %v1177
        %v1210 = vpack.c.bf16 %v1186, %v1178
        %v1211 = vpack.c.bf16 %v1195, %v1187
        %v1212 = vpack.c.bf16 %v1196, %v1188
        %v1213 = vpack.c.bf16 %v1197, %v1189
        %v1214 = vpack.c.bf16 %v1198, %v1190
        %v1215 = vpack.c.bf16 %v1199, %v1191
        %v1216 = vpack.c.bf16 %v1200, %v1192
        %v1217 = vpack.c.bf16 %v1201, %v1193
        %v1218 = vpack.c.bf16 %v1202, %v1194
        %v1219 = vld [vmem:[%s3] sm:$0xf]
        %v1220 = vld [vmem:[%s4] sm:$0xff]
        %1222 = vset.pattern.permute.xlu0 0
        %1223 = vperm.xlu0 %1222, %v1220
        %v1224 = vpop.permute.xlu0 %1223
        %vm1226 = vcmask 261120
        %v1228 = vsel %vm1226, %v1219, 0
        %1230 = vmatprep.subr.bf16.mxu0 %v1204
        %1231 = vmatpush1.bf16.msra.mxu0 %v1203
        %1232 = vmatprep.subr.bf16.mxu0 %v1212
        %1233 = vmatpush1.bf16.msra.mxu0 %v1211
        %1234 = vmatprep.subr.bf16.mxu0 0
        %1235 = vmatpush1.bf16.msra.mxu0 0
        %1236 = vmatprep.subr.bf16.mxu0 0
        %1237 = vmatpush1.bf16.msra.mxu0 0
        %1238 = vmatprep.subr.bf16.mxu0 0
        %1239 = vmatpush1.bf16.msra.mxu0 0
        %1240 = vmatprep.subr.bf16.mxu0 0
        %1241 = vmatpush1.bf16.msra.mxu0 0
        %1242 = vmatprep.subr.bf16.mxu0 0
        %1243 = vmatpush1.bf16.msra.mxu0 0
        %1244 = vmatprep.subr.bf16.mxu0 0
        %1245 = vmatpush1.bf16.msra.mxu0 0
        %1246 = vmatprep.subr.bf16.mxu0 0
        %1247 = vmatpush1.bf16.msra.mxu0 0
        %1248 = vmatprep.subr.bf16.mxu0 0
        %1249 = vmatpush1.bf16.msra.mxu0 0
        %1250 = vmatprep.subr.bf16.mxu0 0
        %1251 = vmatpush1.bf16.msra.mxu0 0
        %1252 = vmatprep.subr.bf16.mxu0 0
        %1253 = vmatpush1.bf16.msra.mxu0 0
        %1254 = vmatprep.subr.bf16.mxu0 0
        %1255 = vmatpush1.bf16.msra.mxu0 0
        %1256 = vmatprep.subr.bf16.mxu0 0
        %1257 = vmatpush1.bf16.msra.mxu0 0
        %1258 = vmatprep.subr.bf16.mxu0 0
        %1259 = vmatpush1.bf16.msra.mxu0 0
        %1260 = vmatprep.subr.bf16.mxu0 0
        %1261 = vmatpush1.bf16.msra.mxu0 0
        %1262 = vmatprep.mubr.bf16.mxu0 0
        %1263 = vmatmul.mubr.bf16.gmra.mrb[0].mxu0 %v1228
        %v1264 = vpop.f32.mrb[0].mxu0
        %v1265 = vadd.f32 %v1224, %v1264
        %v1266 = vpop.f32.mrb[0].mxu0
        %v1267 = vadd.f32 %v1224, %v1266
        %v1268 = vpop.f32.mrb[0].mxu0
        %v1269 = vpop.f32.mrb[0].mxu0
        %1270 = vdwg.mxu0
        %1271 = vmatprep.subr.bf16.mxu0 %v1206
        %1272 = vmatpush1.bf16.msra.mxu0 %v1205
        %1273 = vmatprep.subr.bf16.mxu0 %v1214
        %1274 = vmatpush1.bf16.msra.mxu0 %v1213
        %1275 = vmatprep.subr.bf16.mxu0 0
        %1276 = vmatpush1.bf16.msra.mxu0 0
        %1277 = vmatprep.subr.bf16.mxu0 0
        %1278 = vmatpush1.bf16.msra.mxu0 0
        %1279 = vmatprep.subr.bf16.mxu0 0
        %1280 = vmatpush1.bf16.msra.mxu0 0
        %1281 = vmatprep.subr.bf16.mxu0 0
        %1282 = vmatpush1.bf16.msra.mxu0 0
        %1283 = vmatprep.subr.bf16.mxu0 0
        %1284 = vmatpush1.bf16.msra.mxu0 0
        %1285 = vmatprep.subr.bf16.mxu0 0
        %1286 = vmatpush1.bf16.msra.mxu0 0
        %1287 = vmatprep.subr.bf16.mxu0 0
        %1288 = vmatpush1.bf16.msra.mxu0 0
        %1289 = vmatprep.subr.bf16.mxu0 0
        %1290 = vmatpush1.bf16.msra.mxu0 0
        %1291 = vmatprep.subr.bf16.mxu0 0
        %1292 = vmatpush1.bf16.msra.mxu0 0
        %1293 = vmatprep.subr.bf16.mxu0 0
        %1294 = vmatpush1.bf16.msra.mxu0 0
        %1295 = vmatprep.subr.bf16.mxu0 0
        %1296 = vmatpush1.bf16.msra.mxu0 0
        %1297 = vmatprep.subr.bf16.mxu0 0
        %1298 = vmatpush1.bf16.msra.mxu0 0
        %1299 = vmatprep.subr.bf16.mxu0 0
        %1300 = vmatpush1.bf16.msra.mxu0 0
        %1301 = vmatprep.subr.bf16.mxu0 0
        %1302 = vmatpush1.bf16.msra.mxu0 0
        %1303 = vmatprep.mubr.bf16.mxu0 0
        %1304 = vmatmul.mubr.bf16.gmra.mrb[0].mxu0 %v1228
        %v1305 = vpop.f32.mrb[0].mxu0
        %v1306 = vadd.f32 %v1224, %v1305
        %v1307 = vpop.f32.mrb[0].mxu0
        %v1308 = vadd.f32 %v1224, %v1307
        %v1309 = vpop.f32.mrb[0].mxu0
        %v1310 = vpop.f32.mrb[0].mxu0
        %1311 = vdwg.mxu0
        %1312 = vmatprep.subr.bf16.mxu0 %v1208
        %1313 = vmatpush1.bf16.msra.mxu0 %v1207
        %1314 = vmatprep.subr.bf16.mxu0 %v1216
        %1315 = vmatpush1.bf16.msra.mxu0 %v1215
        %1316 = vmatprep.subr.bf16.mxu0 0
        %1317 = vmatpush1.bf16.msra.mxu0 0
        %1318 = vmatprep.subr.bf16.mxu0 0
        %1319 = vmatpush1.bf16.msra.mxu0 0
        %1320 = vmatprep.subr.bf16.mxu0 0
        %1321 = vmatpush1.bf16.msra.mxu0 0
        %1322 = vmatprep.subr.bf16.mxu0 0
        %1323 = vmatpush1.bf16.msra.mxu0 0
        %1324 = vmatprep.subr.bf16.mxu0 0
        %1325 = vmatpush1.bf16.msra.mxu0 0
        %1326 = vmatprep.subr.bf16.mxu0 0
        %1327 = vmatpush1.bf16.msra.mxu0 0
        %1328 = vmatprep.subr.bf16.mxu0 0
        %1329 = vmatpush1.bf16.msra.mxu0 0
        %1330 = vmatprep.subr.bf16.mxu0 0
        %1331 = vmatpush1.bf16.msra.mxu0 0
        %1332 = vmatprep.subr.bf16.mxu0 0
        %1333 = vmatpush1.bf16.msra.mxu0 0
        %1334 = vmatprep.subr.bf16.mxu0 0
        %1335 = vmatpush1.bf16.msra.mxu0 0
        %1336 = vmatprep.subr.bf16.mxu0 0
        %1337 = vmatpush1.bf16.msra.mxu0 0
        %1338 = vmatprep.subr.bf16.mxu0 0
        %1339 = vmatpush1.bf16.msra.mxu0 0
        %1340 = vmatprep.subr.bf16.mxu0 0
        %1341 = vmatpush1.bf16.msra.mxu0 0
        %1342 = vmatprep.subr.bf16.mxu0 0
        %1343 = vmatpush1.bf16.msra.mxu0 0
        %1344 = vmatprep.mubr.bf16.mxu0 0
        %1345 = vmatmul.mubr.bf16.gmra.mrb[0].mxu0 %v1228
        %v1346 = vpop.f32.mrb[0].mxu0
        %v1347 = vadd.f32 %v1224, %v1346
        %v1348 = vpop.f32.mrb[0].mxu0
        %v1349 = vadd.f32 %v1224, %v1348
        %v1350 = vpop.f32.mrb[0].mxu0
        %v1351 = vpop.f32.mrb[0].mxu0
        %1352 = vdwg.mxu0
        %1353 = vmatprep.subr.bf16.mxu0 %v1210
        %1354 = vmatpush1.bf16.msra.mxu0 %v1209
        %1355 = vmatprep.subr.bf16.mxu0 %v1218
        %1356 = vmatpush1.bf16.msra.mxu0 %v1217
        %1357 = vmatprep.subr.bf16.mxu0 0
        %1358 = vmatpush1.bf16.msra.mxu0 0
        %1359 = vmatprep.subr.bf16.mxu0 0
        %1360 = vmatpush1.bf16.msra.mxu0 0
        %1361 = vmatprep.subr.bf16.mxu0 0
        %1362 = vmatpush1.bf16.msra.mxu0 0
        %1363 = vmatprep.subr.bf16.mxu0 0
        %1364 = vmatpush1.bf16.msra.mxu0 0
        %1365 = vmatprep.subr.bf16.mxu0 0
        %1366 = vmatpush1.bf16.msra.mxu0 0
        %1367 = vmatprep.subr.bf16.mxu0 0
        %1368 = vmatpush1.bf16.msra.mxu0 0
        %1369 = vmatprep.subr.bf16.mxu0 0
        %1370 = vmatpush1.bf16.msra.mxu0 0
        %1371 = vmatprep.subr.bf16.mxu0 0
        %1372 = vmatpush1.bf16.msra.mxu0 0
        %1373 = vmatprep.subr.bf16.mxu0 0
        %1374 = vmatpush1.bf16.msra.mxu0 0
        %1375 = vmatprep.subr.bf16.mxu0 0
        %1376 = vmatpush1.bf16.msra.mxu0 0
        %1377 = vmatprep.subr.bf16.mxu0 0
        %1378 = vmatpush1.bf16.msra.mxu0 0
        %1379 = vmatprep.subr.bf16.mxu0 0
        %1380 = vmatpush1.bf16.msra.mxu0 0
        %1381 = vmatprep.subr.bf16.mxu0 0
        %1382 = vmatpush1.bf16.msra.mxu0 0
        %1383 = vmatprep.subr.bf16.mxu0 0
        %1384 = vmatpush1.bf16.msra.mxu0 0
        %1385 = vmatprep.mubr.bf16.mxu0 0
        %1386 = vmatmul.mubr.bf16.gmra.mrb[0].mxu0 %v1228
        %v1387 = vpop.f32.mrb[0].mxu0
        %v1388 = vadd.f32 %v1224, %v1387
        %v1389 = vpop.f32.mrb[0].mxu0
        %v1390 = vadd.f32 %v1224, %v1389
        %v1391 = vpop.f32.mrb[0].mxu0
        %v1392 = vpop.f32.mrb[0].mxu0
        %1393 = vdwg.mxu0
        %v1394 = vmul.f32 %v1265, 0.5
        %v1395 = vmul.f32 %v1267, 0.5
        %v1396 = vmul.f32 %v1306, 0.5
        %v1397 = vmul.f32 %v1308, 0.5
        %v1398 = vmul.f32 %v1347, 0.5
        %v1399 = vmul.f32 %v1349, 0.5
        %v1400 = vmul.f32 %v1388, 0.5
        %v1401 = vmul.f32 %v1390, 0.5
        %v1402 = vmul.f32 %v1394, 1.442695
        %v1403 = vpow.pop %v1402
        %v1404 = vmul.f32 %v1395, 1.442695
        %v1405 = vpow.pop %v1404
        %v1406 = vmul.f32 %v1396, 1.442695
        %v1407 = vpow.pop %v1406
        %v1408 = vmul.f32 %v1397, 1.442695
        %v1409 = vpow.pop %v1408
        %v1410 = vmul.f32 %v1398, 1.442695
        %v1411 = vpow.pop %v1410
        %v1412 = vmul.f32 %v1399, 1.442695
        %v1413 = vpow.pop %v1412
        %v1414 = vmul.f32 %v1400, 1.442695
        %v1415 = vpow.pop %v1414
        %v1416 = vmul.f32 %v1401, 1.442695
        %v1417 = vpow.pop %v1416
        %v1418 = vmul.f32 %v818, %v1403
        %v1419 = vmul.f32 %v819, %v1405
        %v1420 = vmul.f32 %v820, %v1407
        %v1421 = vmul.f32 %v821, %v1409
        %v1422 = vmul.f32 %v822, %v1411
        %v1423 = vmul.f32 %v823, %v1413
        %v1424 = vmul.f32 %v824, %v1415
        %v1425 = vmul.f32 %v825, %v1417
        %v1434 = vrot.slane %v1418, 4
        %v1435 = vrot.slane %v1419, 4
        %v1436 = vrot.slane %v1420, 4
        %v1437 = vrot.slane %v1421, 4
        %v1438 = vrot.slane %v1422, 4
        %v1439 = vrot.slane %v1423, 4
        %v1440 = vrot.slane %v1424, 4
        %v1441 = vrot.slane %v1425, 4
        %v1450 = vsub.f32 %v1394, %v1434
        %v1451 = vsub.f32 %v1395, %v1435
        %v1452 = vsub.f32 %v1396, %v1436
        %v1453 = vsub.f32 %v1397, %v1437
        %v1454 = vsub.f32 %v1398, %v1438
        %v1455 = vsub.f32 %v1399, %v1439
        %v1456 = vsub.f32 %v1400, %v1440
        %v1457 = vsub.f32 %v1401, %v1441
        %v1466 = vrot.slane %v1450, 7
        %v1467 = vrot.slane %v1451, 7
        %v1468 = vrot.slane %v1452, 7
        %v1469 = vrot.slane %v1453, 7
        %v1470 = vrot.slane %v1454, 7
        %v1471 = vrot.slane %v1455, 7
        %v1472 = vrot.slane %v1456, 7
        %v1473 = vrot.slane %v1457, 7
        %vm1482 = vcmp.gt.f32.partialorder %v1450, %v1466
        %vm1483 = vcmp.gt.f32.partialorder %v1451, %v1467
        %vm1484 = vcmp.gt.f32.partialorder %v1452, %v1468
        %vm1485 = vcmp.gt.f32.partialorder %v1453, %v1469
        %vm1486 = vcmp.gt.f32.partialorder %v1454, %v1470
        %vm1487 = vcmp.gt.f32.partialorder %v1455, %v1471
        %vm1488 = vcmp.gt.f32.partialorder %v1456, %v1472
        %vm1489 = vcmp.gt.f32.partialorder %v1457, %v1473
        %v1490 = vsel %vm1482, %v1450, %v1466
        %v1491 = vsel %vm1483, %v1451, %v1467
        %v1492 = vsel %vm1484, %v1452, %v1468
        %v1493 = vsel %vm1485, %v1453, %v1469
        %v1494 = vsel %vm1486, %v1454, %v1470
        %v1495 = vsel %vm1487, %v1455, %v1471
        %v1496 = vsel %vm1488, %v1456, %v1472
        %v1497 = vsel %vm1489, %v1457, %v1473
        %v1498 = vsel %vm1482, 1, 0
        %v1499 = vsel %vm1483, 1, 0
        %v1500 = vsel %vm1484, 1, 0
        %v1501 = vsel %vm1485, 1, 0
        %v1502 = vsel %vm1486, 1, 0
        %v1503 = vsel %vm1487, 1, 0
        %v1504 = vsel %vm1488, 1, 0
        %v1505 = vsel %vm1489, 1, 0
        %v1514 = vrot.slane %v1490, 7
        %v1515 = vrot.slane %v1491, 7
        %v1516 = vrot.slane %v1492, 7
        %v1517 = vrot.slane %v1493, 7
        %v1518 = vrot.slane %v1494, 7
        %v1519 = vrot.slane %v1495, 7
        %v1520 = vrot.slane %v1496, 7
        %v1521 = vrot.slane %v1497, 7
        %vm1530 = vcmp.gt.f32.partialorder %v1450, %v1514
        %vm1531 = vcmp.gt.f32.partialorder %v1451, %v1515
        %vm1532 = vcmp.gt.f32.partialorder %v1452, %v1516
        %vm1533 = vcmp.gt.f32.partialorder %v1453, %v1517
        %vm1534 = vcmp.gt.f32.partialorder %v1454, %v1518
        %vm1535 = vcmp.gt.f32.partialorder %v1455, %v1519
        %vm1536 = vcmp.gt.f32.partialorder %v1456, %v1520
        %vm1537 = vcmp.gt.f32.partialorder %v1457, %v1521
        %v1538 = vsel %vm1530, %v1450, %v1514
        %v1539 = vsel %vm1531, %v1451, %v1515
        %v1540 = vsel %vm1532, %v1452, %v1516
        %v1541 = vsel %vm1533, %v1453, %v1517
        %v1542 = vsel %vm1534, %v1454, %v1518
        %v1543 = vsel %vm1535, %v1455, %v1519
        %v1544 = vsel %vm1536, %v1456, %v1520
        %v1545 = vsel %vm1537, %v1457, %v1521
        %v1546 = vrot.slane %v1498, 7
        %v1547 = vrot.slane %v1499, 7
        %v1548 = vrot.slane %v1500, 7
        %v1549 = vrot.slane %v1501, 7
        %v1550 = vrot.slane %v1502, 7
        %v1551 = vrot.slane %v1503, 7
        %v1552 = vrot.slane %v1504, 7
        %v1553 = vrot.slane %v1505, 7
        %v1554 = vsel %vm1530, 2, %v1546
        %v1555 = vsel %vm1531, 2, %v1547
        %v1556 = vsel %vm1532, 2, %v1548
        %v1557 = vsel %vm1533, 2, %v1549
        %v1558 = vsel %vm1534, 2, %v1550
        %v1559 = vsel %vm1535, 2, %v1551
        %v1560 = vsel %vm1536, 2, %v1552
        %v1561 = vsel %vm1537, 2, %v1553
        %v1570 = vrot.slane %v1538, 7
        %v1571 = vrot.slane %v1539, 7
        %v1572 = vrot.slane %v1540, 7
        %v1573 = vrot.slane %v1541, 7
        %v1574 = vrot.slane %v1542, 7
        %v1575 = vrot.slane %v1543, 7
        %v1576 = vrot.slane %v1544, 7
        %v1577 = vrot.slane %v1545, 7
        %vm1586 = vcmp.gt.f32.partialorder %v1450, %v1570
        %vm1587 = vcmp.gt.f32.partialorder %v1451, %v1571
        %vm1588 = vcmp.gt.f32.partialorder %v1452, %v1572
        %vm1589 = vcmp.gt.f32.partialorder %v1453, %v1573
        %vm1590 = vcmp.gt.f32.partialorder %v1454, %v1574
        %vm1591 = vcmp.gt.f32.partialorder %v1455, %v1575
        %vm1592 = vcmp.gt.f32.partialorder %v1456, %v1576
        %vm1593 = vcmp.gt.f32.partialorder %v1457, %v1577
        %v1594 = vrot.slane %v1554, 7
        %v1595 = vrot.slane %v1555, 7
        %v1596 = vrot.slane %v1556, 7
        %v1597 = vrot.slane %v1557, 7
        %v1598 = vrot.slane %v1558, 7
        %v1599 = vrot.slane %v1559, 7
        %v1600 = vrot.slane %v1560, 7
        %v1601 = vrot.slane %v1561, 7
        %v1602 = vsel %vm1586, 3, %v1594
        %v1603 = vsel %vm1587, 3, %v1595
        %v1604 = vsel %vm1588, 3, %v1596
        %v1605 = vsel %vm1589, 3, %v1597
        %v1606 = vsel %vm1590, 3, %v1598
        %v1607 = vsel %vm1591, 3, %v1599
        %v1608 = vsel %vm1592, 3, %v1600
        %v1609 = vsel %vm1593, 3, %v1601
        %v1610 = vlaneseq
        %v1611 = vshrl.u32 %v1610, 7
        %v1612 = vlaneseq
        %v1613 = vshrl.u32 %v1612, 7
        %v1614 = vsub.s32 7, %v1613
        %v1615 = vrot.slane %v1602, %v1614
        %v1616 = vlaneseq
        %v1617 = vshrl.u32 %v1616, 7
        %v1618 = vsub.s32 7, %v1617
        %v1619 = vrot.slane %v1603, %v1618
        %v1620 = vlaneseq
        %v1621 = vshrl.u32 %v1620, 7
        %v1622 = vsub.s32 7, %v1621
        %v1623 = vrot.slane %v1604, %v1622
        %v1624 = vlaneseq
        %v1625 = vshrl.u32 %v1624, 7
        %v1626 = vsub.s32 7, %v1625
        %v1627 = vrot.slane %v1605, %v1626
        %v1628 = vlaneseq
        %v1629 = vshrl.u32 %v1628, 7
        %v1630 = vsub.s32 7, %v1629
        %v1631 = vrot.slane %v1606, %v1630
        %v1632 = vlaneseq
        %v1633 = vshrl.u32 %v1632, 7
        %v1634 = vsub.s32 7, %v1633
        %v1635 = vrot.slane %v1607, %v1634
        %v1636 = vlaneseq
        %v1637 = vshrl.u32 %v1636, 7
        %v1638 = vsub.s32 7, %v1637
        %v1639 = vrot.slane %v1608, %v1638
        %v1640 = vlaneseq
        %v1641 = vshrl.u32 %v1640, 7
        %v1642 = vsub.s32 7, %v1641
        %v1643 = vrot.slane %v1609, %v1642
        %vm1644 = vcmp.eq.s32.totalorder %v1615, %v1611
        %vm1645 = vcmp.eq.s32.totalorder %v1619, %v1611
        %vm1646 = vcmp.eq.s32.totalorder %v1623, %v1611
        %vm1647 = vcmp.eq.s32.totalorder %v1627, %v1611
        %vm1648 = vcmp.eq.s32.totalorder %v1631, %v1611
        %vm1649 = vcmp.eq.s32.totalorder %v1635, %v1611
        %vm1650 = vcmp.eq.s32.totalorder %v1639, %v1611
        %vm1651 = vcmp.eq.s32.totalorder %v1643, %v1611
        %v1652 = vsel %vm1644, 1, 0
        %v1653 = vsel %vm1645, 1, 0
        %v1654 = vsel %vm1646, 1, 0
        %v1655 = vsel %vm1647, 1, 0
        %v1656 = vsel %vm1648, 1, 0
        %v1657 = vsel %vm1649, 1, 0
        %v1658 = vsel %vm1650, 1, 0
        %v1659 = vsel %vm1651, 1, 0
        %v1660 = vcvt.s32.f32 %v1652
        %v1661 = vcvt.s32.f32 %v1653
        %v1662 = vcvt.s32.f32 %v1654
        %v1663 = vcvt.s32.f32 %v1655
        %v1664 = vcvt.s32.f32 %v1656
        %v1665 = vcvt.s32.f32 %v1657
        %v1666 = vcvt.s32.f32 %v1658
        %v1667 = vcvt.s32.f32 %v1659
        %v1676 = vrot.slane %v1660, 4
        %v1677 = vrot.slane %v1661, 4
        %v1678 = vrot.slane %v1662, 4
        %v1679 = vrot.slane %v1663, 4
        %v1680 = vrot.slane %v1664, 4
        %v1681 = vrot.slane %v1665, 4
        %v1682 = vrot.slane %v1666, 4
        %v1683 = vrot.slane %v1667, 4
        %v1692 = vmul.f32 %v385, %v1676
        %v1693 = vmul.f32 %v387, %v1677
        %v1694 = vmul.f32 %v498, %v1678
        %v1695 = vmul.f32 %v500, %v1679
        %v1696 = vmul.f32 %v611, %v1680
        %v1697 = vmul.f32 %v613, %v1681
        %v1698 = vmul.f32 %v724, %v1682
        %v1699 = vmul.f32 %v726, %v1683
        %v1708 = vrot.slane %v1692, 4
        %v1709 = vrot.slane %v1693, 4
        %v1710 = vrot.slane %v1694, 4
        %v1711 = vrot.slane %v1695, 4
        %v1712 = vrot.slane %v1696, 4
        %v1713 = vrot.slane %v1697, 4
        %v1714 = vrot.slane %v1698, 4
        %v1715 = vrot.slane %v1699, 4
        %v1724 = vsel %vm252, %v1708, 0.0
        %v1725 = vrot.slane %v1724, 4
        %v1726 = vadd.f32 %v1724, %v1725
        %v1727 = vrot.slane %v1726, 2
        %v1728 = vadd.f32 %v1726, %v1727
        %v1729 = vrot.slane %v1728, 1
        %v1730 = vadd.f32 %v1728, %v1729
        %v1731 = vsel %vm252, %v1709, 0.0
        %v1732 = vrot.slane %v1731, 4
        %v1733 = vadd.f32 %v1731, %v1732
        %v1734 = vrot.slane %v1733, 2
        %v1735 = vadd.f32 %v1733, %v1734
        %v1736 = vrot.slane %v1735, 1
        %v1737 = vadd.f32 %v1735, %v1736
        %v1738 = vsel %vm252, %v1710, 0.0
        %v1739 = vrot.slane %v1738, 4
        %v1740 = vadd.f32 %v1738, %v1739
        %v1741 = vrot.slane %v1740, 2
        %v1742 = vadd.f32 %v1740, %v1741
        %v1743 = vrot.slane %v1742, 1
        %v1744 = vadd.f32 %v1742, %v1743
        %v1745 = vsel %vm252, %v1711, 0.0
        %v1746 = vrot.slane %v1745, 4
        %v1747 = vadd.f32 %v1745, %v1746
        %v1748 = vrot.slane %v1747, 2
        %v1749 = vadd.f32 %v1747, %v1748
        %v1750 = vrot.slane %v1749, 1
        %v1751 = vadd.f32 %v1749, %v1750
        %v1752 = vsel %vm252, %v1712, 0.0
        %v1753 = vrot.slane %v1752, 4
        %v1754 = vadd.f32 %v1752, %v1753
        %v1755 = vrot.slane %v1754, 2
        %v1756 = vadd.f32 %v1754, %v1755
        %v1757 = vrot.slane %v1756, 1
        %v1758 = vadd.f32 %v1756, %v1757
        %v1759 = vsel %vm252, %v1713, 0.0
        %v1760 = vrot.slane %v1759, 4
        %v1761 = vadd.f32 %v1759, %v1760
        %v1762 = vrot.slane %v1761, 2
        %v1763 = vadd.f32 %v1761, %v1762
        %v1764 = vrot.slane %v1763, 1
        %v1765 = vadd.f32 %v1763, %v1764
        %v1766 = vsel %vm252, %v1714, 0.0
        %v1767 = vrot.slane %v1766, 4
        %v1768 = vadd.f32 %v1766, %v1767
        %v1769 = vrot.slane %v1768, 2
        %v1770 = vadd.f32 %v1768, %v1769
        %v1771 = vrot.slane %v1770, 1
        %v1772 = vadd.f32 %v1770, %v1771
        %v1773 = vsel %vm252, %v1715, 0.0
        %v1774 = vrot.slane %v1773, 4
        %v1775 = vadd.f32 %v1773, %v1774
        %v1776 = vrot.slane %v1775, 2
        %v1777 = vadd.f32 %v1775, %v1776
        %v1778 = vrot.slane %v1777, 1
        %v1779 = vadd.f32 %v1777, %v1778
        %v1780 = vmul.f32 %v391, %v1660
        %v1781 = vmul.f32 %v393, %v1661
        %v1782 = vmul.f32 %v504, %v1662
        %v1783 = vmul.f32 %v506, %v1663
        %v1784 = vmul.f32 %v617, %v1664
        %v1785 = vmul.f32 %v619, %v1665
        %v1786 = vmul.f32 %v730, %v1666
        %v1787 = vmul.f32 %v732, %v1667
        %v1788 = vsel %vm252, %v1780, 0.0
        %v1789 = vrot.slane %v1788, 4
        %v1790 = vadd.f32 %v1788, %v1789
        %v1791 = vrot.slane %v1790, 2
        %v1792 = vadd.f32 %v1790, %v1791
        %v1793 = vrot.slane %v1792, 1
        %v1794 = vadd.f32 %v1792, %v1793
        %v1795 = vsel %vm252, %v1781, 0.0
        %v1796 = vrot.slane %v1795, 4
        %v1797 = vadd.f32 %v1795, %v1796
        %v1798 = vrot.slane %v1797, 2
        %v1799 = vadd.f32 %v1797, %v1798
        %v1800 = vrot.slane %v1799, 1
        %v1801 = vadd.f32 %v1799, %v1800
        %v1802 = vsel %vm252, %v1782, 0.0
        %v1803 = vrot.slane %v1802, 4
        %v1804 = vadd.f32 %v1802, %v1803
        %v1805 = vrot.slane %v1804, 2
        %v1806 = vadd.f32 %v1804, %v1805
        %v1807 = vrot.slane %v1806, 1
        %v1808 = vadd.f32 %v1806, %v1807
        %v1809 = vsel %vm252, %v1783, 0.0
        %v1810 = vrot.slane %v1809, 4
        %v1811 = vadd.f32 %v1809, %v1810
        %v1812 = vrot.slane %v1811, 2
        %v1813 = vadd.f32 %v1811, %v1812
        %v1814 = vrot.slane %v1813, 1
        %v1815 = vadd.f32 %v1813, %v1814
        %v1816 = vsel %vm252, %v1784, 0.0
        %v1817 = vrot.slane %v1816, 4
        %v1818 = vadd.f32 %v1816, %v1817
        %v1819 = vrot.slane %v1818, 2
        %v1820 = vadd.f32 %v1818, %v1819
        %v1821 = vrot.slane %v1820, 1
        %v1822 = vadd.f32 %v1820, %v1821
        %v1823 = vsel %vm252, %v1785, 0.0
        %v1824 = vrot.slane %v1823, 4
        %v1825 = vadd.f32 %v1823, %v1824
        %v1826 = vrot.slane %v1825, 2
        %v1827 = vadd.f32 %v1825, %v1826
        %v1828 = vrot.slane %v1827, 1
        %v1829 = vadd.f32 %v1827, %v1828
        %v1830 = vsel %vm252, %v1786, 0.0
        %v1831 = vrot.slane %v1830, 4
        %v1832 = vadd.f32 %v1830, %v1831
        %v1833 = vrot.slane %v1832, 2
        %v1834 = vadd.f32 %v1832, %v1833
        %v1835 = vrot.slane %v1834, 1
        %v1836 = vadd.f32 %v1834, %v1835
        %v1837 = vsel %vm252, %v1787, 0.0
        %v1838 = vrot.slane %v1837, 4
        %v1839 = vadd.f32 %v1837, %v1838
        %v1840 = vrot.slane %v1839, 2
        %v1841 = vadd.f32 %v1839, %v1840
        %v1842 = vrot.slane %v1841, 1
        %v1843 = vadd.f32 %v1841, %v1842
        %v1844 = vmul.f32 %v391, %v1676
        %v1845 = vmul.f32 %v393, %v1677
        %v1846 = vmul.f32 %v504, %v1678
        %v1847 = vmul.f32 %v506, %v1679
        %v1848 = vmul.f32 %v617, %v1680
        %v1849 = vmul.f32 %v619, %v1681
        %v1850 = vmul.f32 %v730, %v1682
        %v1851 = vmul.f32 %v732, %v1683
        %v1860 = vrot.slane %v1844, 4
        %v1861 = vrot.slane %v1845, 4
        %v1862 = vrot.slane %v1846, 4
        %v1863 = vrot.slane %v1847, 4
        %v1864 = vrot.slane %v1848, 4
        %v1865 = vrot.slane %v1849, 4
        %v1866 = vrot.slane %v1850, 4
        %v1867 = vrot.slane %v1851, 4
        %v1876 = vsel %vm252, %v1860, 0.0
        %v1877 = vrot.slane %v1876, 4
        %v1878 = vadd.f32 %v1876, %v1877
        %v1879 = vrot.slane %v1878, 2
        %v1880 = vadd.f32 %v1878, %v1879
        %v1881 = vrot.slane %v1880, 1
        %v1882 = vadd.f32 %v1880, %v1881
        %v1883 = vsel %vm252, %v1861, 0.0
        %v1884 = vrot.slane %v1883, 4
        %v1885 = vadd.f32 %v1883, %v1884
        %v1886 = vrot.slane %v1885, 2
        %v1887 = vadd.f32 %v1885, %v1886
        %v1888 = vrot.slane %v1887, 1
        %v1889 = vadd.f32 %v1887, %v1888
        %v1890 = vsel %vm252, %v1862, 0.0
        %v1891 = vrot.slane %v1890, 4
        %v1892 = vadd.f32 %v1890, %v1891
        %v1893 = vrot.slane %v1892, 2
        %v1894 = vadd.f32 %v1892, %v1893
        %v1895 = vrot.slane %v1894, 1
        %v1896 = vadd.f32 %v1894, %v1895
        %v1897 = vsel %vm252, %v1863, 0.0
        %v1898 = vrot.slane %v1897, 4
        %v1899 = vadd.f32 %v1897, %v1898
        %v1900 = vrot.slane %v1899, 2
        %v1901 = vadd.f32 %v1899, %v1900
        %v1902 = vrot.slane %v1901, 1
        %v1903 = vadd.f32 %v1901, %v1902
        %v1904 = vsel %vm252, %v1864, 0.0
        %v1905 = vrot.slane %v1904, 4
        %v1906 = vadd.f32 %v1904, %v1905
        %v1907 = vrot.slane %v1906, 2
        %v1908 = vadd.f32 %v1906, %v1907
        %v1909 = vrot.slane %v1908, 1
        %v1910 = vadd.f32 %v1908, %v1909
        %v1911 = vsel %vm252, %v1865, 0.0
        %v1912 = vrot.slane %v1911, 4
        %v1913 = vadd.f32 %v1911, %v1912
        %v1914 = vrot.slane %v1913, 2
        %v1915 = vadd.f32 %v1913, %v1914
        %v1916 = vrot.slane %v1915, 1
        %v1917 = vadd.f32 %v1915, %v1916
        %v1918 = vsel %vm252, %v1866, 0.0
        %v1919 = vrot.slane %v1918, 4
        %v1920 = vadd.f32 %v1918, %v1919
        %v1921 = vrot.slane %v1920, 2
        %v1922 = vadd.f32 %v1920, %v1921
        %v1923 = vrot.slane %v1922, 1
        %v1924 = vadd.f32 %v1922, %v1923
        %v1925 = vsel %vm252, %v1867, 0.0
        %v1926 = vrot.slane %v1925, 4
        %v1927 = vadd.f32 %v1925, %v1926
        %v1928 = vrot.slane %v1927, 2
        %v1929 = vadd.f32 %v1927, %v1928
        %v1930 = vrot.slane %v1929, 1
        %v1931 = vadd.f32 %v1929, %v1930
        %v1932 = vmul.f32 %v397, %v1660
        %v1933 = vmul.f32 %v399, %v1661
        %v1934 = vmul.f32 %v510, %v1662
        %v1935 = vmul.f32 %v512, %v1663
        %v1936 = vmul.f32 %v623, %v1664
        %v1937 = vmul.f32 %v625, %v1665
        %v1938 = vmul.f32 %v736, %v1666
        %v1939 = vmul.f32 %v738, %v1667
        %v1940 = vsel %vm252, %v1932, 0.0
        %v1941 = vrot.slane %v1940, 4
        %v1942 = vadd.f32 %v1940, %v1941
        %v1943 = vrot.slane %v1942, 2
        %v1944 = vadd.f32 %v1942, %v1943
        %v1945 = vrot.slane %v1944, 1
        %v1946 = vadd.f32 %v1944, %v1945
        %v1947 = vsel %vm252, %v1933, 0.0
        %v1948 = vrot.slane %v1947, 4
        %v1949 = vadd.f32 %v1947, %v1948
        %v1950 = vrot.slane %v1949, 2
        %v1951 = vadd.f32 %v1949, %v1950
        %v1952 = vrot.slane %v1951, 1
        %v1953 = vadd.f32 %v1951, %v1952
        %v1954 = vsel %vm252, %v1934, 0.0
        %v1955 = vrot.slane %v1954, 4
        %v1956 = vadd.f32 %v1954, %v1955
        %v1957 = vrot.slane %v1956, 2
        %v1958 = vadd.f32 %v1956, %v1957
        %v1959 = vrot.slane %v1958, 1
        %v1960 = vadd.f32 %v1958, %v1959
        %v1961 = vsel %vm252, %v1935, 0.0
        %v1962 = vrot.slane %v1961, 4
        %v1963 = vadd.f32 %v1961, %v1962
        %v1964 = vrot.slane %v1963, 2
        %v1965 = vadd.f32 %v1963, %v1964
        %v1966 = vrot.slane %v1965, 1
        %v1967 = vadd.f32 %v1965, %v1966
        %v1968 = vsel %vm252, %v1936, 0.0
        %v1969 = vrot.slane %v1968, 4
        %v1970 = vadd.f32 %v1968, %v1969
        %v1971 = vrot.slane %v1970, 2
        %v1972 = vadd.f32 %v1970, %v1971
        %v1973 = vrot.slane %v1972, 1
        %v1974 = vadd.f32 %v1972, %v1973
        %v1975 = vsel %vm252, %v1937, 0.0
        %v1976 = vrot.slane %v1975, 4
        %v1977 = vadd.f32 %v1975, %v1976
        %v1978 = vrot.slane %v1977, 2
        %v1979 = vadd.f32 %v1977, %v1978
        %v1980 = vrot.slane %v1979, 1
        %v1981 = vadd.f32 %v1979, %v1980
        %v1982 = vsel %vm252, %v1938, 0.0
        %v1983 = vrot.slane %v1982, 4
        %v1984 = vadd.f32 %v1982, %v1983
        %v1985 = vrot.slane %v1984, 2
        %v1986 = vadd.f32 %v1984, %v1985
        %v1987 = vrot.slane %v1986, 1
        %v1988 = vadd.f32 %v1986, %v1987
        %v1989 = vsel %vm252, %v1939, 0.0
        %v1990 = vrot.slane %v1989, 4
        %v1991 = vadd.f32 %v1989, %v1990
        %v1992 = vrot.slane %v1991, 2
        %v1993 = vadd.f32 %v1991, %v1992
        %v1994 = vrot.slane %v1993, 1
        %v1995 = vadd.f32 %v1993, %v1994
        %v1996 = vmul.f32 %v397, %v1676
        %v1997 = vmul.f32 %v399, %v1677
        %v1998 = vmul.f32 %v510, %v1678
        %v1999 = vmul.f32 %v512, %v1679
        %v2000 = vmul.f32 %v623, %v1680
        %v2001 = vmul.f32 %v625, %v1681
        %v2002 = vmul.f32 %v736, %v1682
        %v2003 = vmul.f32 %v738, %v1683
        %v2012 = vrot.slane %v1996, 4
        %v2013 = vrot.slane %v1997, 4
        %v2014 = vrot.slane %v1998, 4
        %v2015 = vrot.slane %v1999, 4
        %v2016 = vrot.slane %v2000, 4
        %v2017 = vrot.slane %v2001, 4
        %v2018 = vrot.slane %v2002, 4
        %v2019 = vrot.slane %v2003, 4
        %v2028 = vsel %vm252, %v2012, 0.0
        %v2029 = vrot.slane %v2028, 4
        %v2030 = vadd.f32 %v2028, %v2029
        %v2031 = vrot.slane %v2030, 2
        %v2032 = vadd.f32 %v2030, %v2031
        %v2033 = vrot.slane %v2032, 1
        %v2034 = vadd.f32 %v2032, %v2033
        %v2035 = vsel %vm252, %v2013, 0.0
        %v2036 = vrot.slane %v2035, 4
        %v2037 = vadd.f32 %v2035, %v2036
        %v2038 = vrot.slane %v2037, 2
        %v2039 = vadd.f32 %v2037, %v2038
        %v2040 = vrot.slane %v2039, 1
        %v2041 = vadd.f32 %v2039, %v2040
        %v2042 = vsel %vm252, %v2014, 0.0
        %v2043 = vrot.slane %v2042, 4
        %v2044 = vadd.f32 %v2042, %v2043
        %v2045 = vrot.slane %v2044, 2
        %v2046 = vadd.f32 %v2044, %v2045
        %v2047 = vrot.slane %v2046, 1
        %v2048 = vadd.f32 %v2046, %v2047
        %v2049 = vsel %vm252, %v2015, 0.0
        %v2050 = vrot.slane %v2049, 4
        %v2051 = vadd.f32 %v2049, %v2050
        %v2052 = vrot.slane %v2051, 2
        %v2053 = vadd.f32 %v2051, %v2052
        %v2054 = vrot.slane %v2053, 1
        %v2055 = vadd.f32 %v2053, %v2054
        %v2056 = vsel %vm252, %v2016, 0.0
        %v2057 = vrot.slane %v2056, 4
        %v2058 = vadd.f32 %v2056, %v2057
        %v2059 = vrot.slane %v2058, 2
        %v2060 = vadd.f32 %v2058, %v2059
        %v2061 = vrot.slane %v2060, 1
        %v2062 = vadd.f32 %v2060, %v2061
        %v2063 = vsel %vm252, %v2017, 0.0
        %v2064 = vrot.slane %v2063, 4
        %v2065 = vadd.f32 %v2063, %v2064
        %v2066 = vrot.slane %v2065, 2
        %v2067 = vadd.f32 %v2065, %v2066
        %v2068 = vrot.slane %v2067, 1
        %v2069 = vadd.f32 %v2067, %v2068
        %v2070 = vsel %vm252, %v2018, 0.0
        %v2071 = vrot.slane %v2070, 4
        %v2072 = vadd.f32 %v2070, %v2071
        %v2073 = vrot.slane %v2072, 2
        %v2074 = vadd.f32 %v2072, %v2073
        %v2075 = vrot.slane %v2074, 1
        %v2076 = vadd.f32 %v2074, %v2075
        %v2077 = vsel %vm252, %v2019, 0.0
        %v2078 = vrot.slane %v2077, 4
        %v2079 = vadd.f32 %v2077, %v2078
        %v2080 = vrot.slane %v2079, 2
        %v2081 = vadd.f32 %v2079, %v2080
        %v2082 = vrot.slane %v2081, 1
        %v2083 = vadd.f32 %v2081, %v2082
        %v2084 = vmul.f32 %v403, %v1660
        %v2085 = vmul.f32 %v405, %v1661
        %v2086 = vmul.f32 %v516, %v1662
        %v2087 = vmul.f32 %v518, %v1663
        %v2088 = vmul.f32 %v629, %v1664
        %v2089 = vmul.f32 %v631, %v1665
        %v2090 = vmul.f32 %v742, %v1666
        %v2091 = vmul.f32 %v744, %v1667
        %v2092 = vsel %vm252, %v2084, 0.0
        %v2093 = vrot.slane %v2092, 4
        %v2094 = vadd.f32 %v2092, %v2093
        %v2095 = vrot.slane %v2094, 2
        %v2096 = vadd.f32 %v2094, %v2095
        %v2097 = vrot.slane %v2096, 1
        %v2098 = vadd.f32 %v2096, %v2097
        %v2099 = vsel %vm252, %v2085, 0.0
        %v2100 = vrot.slane %v2099, 4
        %v2101 = vadd.f32 %v2099, %v2100
        %v2102 = vrot.slane %v2101, 2
        %v2103 = vadd.f32 %v2101, %v2102
        %v2104 = vrot.slane %v2103, 1
        %v2105 = vadd.f32 %v2103, %v2104
        %v2106 = vsel %vm252, %v2086, 0.0
        %v2107 = vrot.slane %v2106, 4
        %v2108 = vadd.f32 %v2106, %v2107
        %v2109 = vrot.slane %v2108, 2
        %v2110 = vadd.f32 %v2108, %v2109
        %v2111 = vrot.slane %v2110, 1
        %v2112 = vadd.f32 %v2110, %v2111
        %v2113 = vsel %vm252, %v2087, 0.0
        %v2114 = vrot.slane %v2113, 4
        %v2115 = vadd.f32 %v2113, %v2114
        %v2116 = vrot.slane %v2115, 2
        %v2117 = vadd.f32 %v2115, %v2116
        %v2118 = vrot.slane %v2117, 1
        %v2119 = vadd.f32 %v2117, %v2118
        %v2120 = vsel %vm252, %v2088, 0.0
        %v2121 = vrot.slane %v2120, 4
        %v2122 = vadd.f32 %v2120, %v2121
        %v2123 = vrot.slane %v2122, 2
        %v2124 = vadd.f32 %v2122, %v2123
        %v2125 = vrot.slane %v2124, 1
        %v2126 = vadd.f32 %v2124, %v2125
        %v2127 = vsel %vm252, %v2089, 0.0
        %v2128 = vrot.slane %v2127, 4
        %v2129 = vadd.f32 %v2127, %v2128
        %v2130 = vrot.slane %v2129, 2
        %v2131 = vadd.f32 %v2129, %v2130
        %v2132 = vrot.slane %v2131, 1
        %v2133 = vadd.f32 %v2131, %v2132
        %v2134 = vsel %vm252, %v2090, 0.0
        %v2135 = vrot.slane %v2134, 4
        %v2136 = vadd.f32 %v2134, %v2135
        %v2137 = vrot.slane %v2136, 2
        %v2138 = vadd.f32 %v2136, %v2137
        %v2139 = vrot.slane %v2138, 1
        %v2140 = vadd.f32 %v2138, %v2139
        %v2141 = vsel %vm252, %v2091, 0.0
        %v2142 = vrot.slane %v2141, 4
        %v2143 = vadd.f32 %v2141, %v2142
        %v2144 = vrot.slane %v2143, 2
        %v2145 = vadd.f32 %v2143, %v2144
        %v2146 = vrot.slane %v2145, 1
        %v2147 = vadd.f32 %v2145, %v2146
        %v2148 = vcvt.s32.f32 %v1602
        %v2149 = vcvt.s32.f32 %v1603
        %v2150 = vcvt.s32.f32 %v1604
        %v2151 = vcvt.s32.f32 %v1605
        %v2152 = vcvt.s32.f32 %v1606
        %v2153 = vcvt.s32.f32 %v1607
        %v2154 = vcvt.s32.f32 %v1608
        %v2155 = vcvt.s32.f32 %v1609
        %v2164 = vrot.slane %v2148, 1
        %v2165 = vrot.slane %v2149, 1
        %v2166 = vrot.slane %v2150, 1
        %v2167 = vrot.slane %v2151, 1
        %v2168 = vrot.slane %v2152, 1
        %v2169 = vrot.slane %v2153, 1
        %v2170 = vrot.slane %v2154, 1
        %v2171 = vrot.slane %v2155, 1
        %vm2180 = vcmask 1040384
        %v2181 = vsel %vm2180, %v1730, %v1794
        %v2182 = vsel %vm2180, %v1737, %v1801
        %v2183 = vsel %vm2180, %v1744, %v1808
        %v2184 = vsel %vm2180, %v1751, %v1815
        %v2185 = vsel %vm2180, %v1758, %v1822
        %v2186 = vsel %vm2180, %v1765, %v1829
        %v2187 = vsel %vm2180, %v1772, %v1836
        %v2188 = vsel %vm2180, %v1779, %v1843
        %vm2189 = vcmask 1041408
        %v2190 = vsel %vm2189, %v2181, %v1882
        %v2191 = vsel %vm2189, %v2182, %v1889
        %v2192 = vsel %vm2189, %v2183, %v1896
        %v2193 = vsel %vm2189, %v2184, %v1903
        %v2194 = vsel %vm2189, %v2185, %v1910
        %v2195 = vsel %vm2189, %v2186, %v1917
        %v2196 = vsel %vm2189, %v2187, %v1924
        %v2197 = vsel %vm2189, %v2188, %v1931
        %v2198 = vsel %vm243, %v2190, %v1946
        %v2199 = vsel %vm243, %v2191, %v1953
        %v2200 = vsel %vm243, %v2192, %v1960
        %v2201 = vsel %vm243, %v2193, %v1967
        %v2202 = vsel %vm243, %v2194, %v1974
        %v2203 = vsel %vm243, %v2195, %v1981
        %v2204 = vsel %vm243, %v2196, %v1988
        %v2205 = vsel %vm243, %v2197, %v1995
        %v2206 = vsel %vm252, %v2198, %v2034
        %v2207 = vsel %vm252, %v2199, %v2041
        %v2208 = vsel %vm252, %v2200, %v2048
        %v2209 = vsel %vm252, %v2201, %v2055
        %v2210 = vsel %vm252, %v2202, %v2062
        %v2211 = vsel %vm252, %v2203, %v2069
        %v2212 = vsel %vm252, %v2204, %v2076
        %v2213 = vsel %vm252, %v2205, %v2083
        %vm2214 = vcmask 1044480
        %v2215 = vsel %vm2214, %v2206, %v2098
        %v2216 = vsel %vm2214, %v2207, %v2105
        %v2217 = vsel %vm2214, %v2208, %v2112
        %v2218 = vsel %vm2214, %v2209, %v2119
        %v2219 = vsel %vm2214, %v2210, %v2126
        %v2220 = vsel %vm2214, %v2211, %v2133
        %v2221 = vsel %vm2214, %v2212, %v2140
        %v2222 = vsel %vm2214, %v2213, %v2147
        %vm2223 = vcmask 1045504
        %v2224 = vsel %vm2223, %v2215, %v2164
        %v2225 = vsel %vm2223, %v2216, %v2165
        %v2226 = vsel %vm2223, %v2217, %v2166
        %v2227 = vsel %vm2223, %v2218, %v2167
        %v2228 = vsel %vm2223, %v2219, %v2168
        %v2229 = vsel %vm2223, %v2220, %v2169
        %v2230 = vsel %vm2223, %v2221, %v2170
        %v2231 = vsel %vm2223, %v2222, %v2171
        %vm2232 = vcmask 1046528
        %v2233 = vsel %vm2232, %v2224, 0.0
        %v2234 = vsel %vm2232, %v2225, 0.0
        %v2235 = vsel %vm2232, %v2226, 0.0
        %v2236 = vsel %vm2232, %v2227, 0.0
        %v2237 = vsel %vm2232, %v2228, 0.0
        %v2238 = vsel %vm2232, %v2229, 0.0
        %v2239 = vsel %vm2232, %v2230, 0.0
        %v2240 = vsel %vm2232, %v2231, 0.0
        %2241 = vst [vmem:[%s218] sm:$0xff] %v2233
        %2242 = vst [vmem:[%s218 + $0x8] sm:$0xff] %v2234
        %2243 = vst [vmem:[%s218 + $0x10] sm:$0xff] %v2235
        %2244 = vst [vmem:[%s218 + $0x18] sm:$0xff] %v2236
        %2245 = vst [vmem:[%s218 + $0x20] sm:$0xff] %v2237
        %2246 = vst [vmem:[%s218 + $0x28] sm:$0xff] %v2238
        %2247 = vst [vmem:[%s218 + $0x30] sm:$0xff] %v2239
        %2248 = vst [vmem:[%s218 + $0x38] sm:$0xff] %v2240
        %s2249 = sand.u32 %s137, 1
        %s2250 = scalar_lea.sflag [#allocation3], %s2249
        %s2251 = sand.u32 %s137, 1
        %s2252 = smul.addr %s2251, 64
        %s2253 = scalar_lea.vmem [#allocation2], %s2252
        // Predicated region
        $region41: #{tpu_custom_call.1} parent=39 // pred_check
          %p2254 = pneg %p147
        $region42: #{tpu_custom_call.1} parent=39 // pred_check_branch
          %2256 = sbr.rel (%p2254) target = $region44
        $region43: #{tpu_custom_call.1} parent=39 // pred_region
          %s2257 = smul.u32 8, %s19
          %s2259 = ssub.s32 1024, 1024
          %2260 = vsyncadd %s2250, %s2259
          %s2261 = smul.addr %s2257, 128
          %s2262 = scalar_lea.hbm %s5, %s2261
          %s2264 = sshll.u32 %s2253, 4
          %s2265 = int_to_ptr.vmem [resolvable:$true] %s2264
          %2267 = dma.vmem_to_hbm [thread:$0]  %s2265, 1024, %s2262, %s2250
        $region44: #{tpu_custom_call.1} parent=39 // pred_fallthru
          _
      $region40: #{tpu_custom_call.1} parent=5 // pred_fallthru
        _
      %p2268 = scmp.le.s32.totalorder 2, %s14
      // Predicated region
      $region45: #{tpu_custom_call.1} parent=5 // pred_check
        %p2269 = pneg %p2268
      $region46: #{tpu_custom_call.1} parent=5 // pred_check_branch
        %2271 = sbr.rel (%p2269) target = $region48
      $region47: #{tpu_custom_call.1} parent=5 // pred_region
        %s2272 = ssub.s32 %s14, 2
        // Predicated region
        $region49: #{tpu_custom_call.1} parent=47 // pred_check
          %p2273 = pneg %p153
        $region50: #{tpu_custom_call.1} parent=47 // pred_check_branch
          %2275 = sbr.rel (%p2273) target = $region52
        $region51: #{tpu_custom_call.1} parent=47 // pred_region
          %s2276 = sand.u32 %s138, 1
          %s2277 = scalar_lea.sflag [#allocation3], %s2276
          %s2278 = sand.u32 %s138, 1
          %s2279 = smul.addr %s2278, 64
          %s2280 = scalar_lea.vmem [#allocation2], %s2279
          %2281 = dma.done %s2277, 1024
        $region52: #{tpu_custom_call.1} parent=47 // pred_fallthru
          _
      $region48: #{tpu_custom_call.1} parent=5 // pred_fallthru
        _
    $region6: #{tpu_custom_call.1} parent=1 // loop_footer
      %s18 = sadd.s32 1, %s14
    $region7: #{tpu_custom_call.1} parent=1 // loop_footer_branch
      %13 = sbr.rel target = $region3
    $region8: #{tpu_custom_call.1} parent=1 // loop_exit
      _
    %2282 = vsyncpa [#allocation3], 1
    %s2283 = scalar_lea.sflag [#allocation3], 1
    %2284 = vsyncpa %s2283, 1

</llo_original>
